<compile_context>
chip_gen: v7x
topology: tpu7x:2x2x1
jax: 0.10.0
libtpu: 0.0.40
codegen_flags: <defaults>
</compile_context>

<pallas_src>
import jax
import jax.numpy as jnp
from jax.experimental import pallas as pl
from jax.experimental.pallas import tpu as pltpu

# --- module hyper-parameters (from the PyTorch file) -------------------------
DIM = 7
X_DIM = DIM * 64          # 448
C_DIM = DIM * 2           # 14
H_P_DIM = 512
Z_DIM = 32
IN_DIM = Z_DIM + C_DIM    # 46


def _round_up(x, m):
    return (x + m - 1) // m * m


def _choose_tb(B, tb):
    """Pick the batch-tile size.

    Small B  -> a single tile (launch / weight-DMA latency dominated).
    Larger B -> an even number of balanced tiles so that under
                dimension_semantics=("parallel",) the two v7x TensorCores get
                the same amount of work and the partial last tile stays small.
    """
    if B <= 128:
        return _round_up(B, 8)
    n_tiles = max(2, -(-B // tb))        # ceil(B / tb), at least 2
    if n_tiles % 2:
        n_tiles += 1                     # even tile count -> balanced megacore split
    return _round_up(-(-B // n_tiles), 8)


def _decoder_kernel(z_ref, c_ref, w1z_ref, w1c_ref, b1_ref,
                    w2_ref, b2_ref, w3_ref, b3_ref,
                    y_ref, h1_ref, h2_ref):
    """One batch tile: 4 MXU matmuls (bf16 inputs, f32 accumulate) + VPU bias/ReLU."""
    zb = z_ref[...].astype(jnp.bfloat16)
    cb = c_ref[...].astype(jnp.bfloat16)

    # Linear 1 as a split-K pair of dots across the torch.cat boundary + ReLU.
    h1 = (jnp.dot(zb, w1z_ref[...], preferred_element_type=jnp.float32)
          + jnp.dot(cb, w1c_ref[...], preferred_element_type=jnp.float32)
          + b1_ref[...])
    h1_ref[...] = jnp.maximum(h1, 0.0).astype(jnp.bfloat16)   # bf16 scratch store

    # Dropout(p=0.5): eval-mode identity (deterministic forward).
    # TODO(synk): training-mode dropout via pltpu.prng_seed / prng_random_bits.

    # Linear 2 + ReLU.
    h2 = (jnp.dot(h1_ref[...], w2_ref[...],
                  preferred_element_type=jnp.float32) + b2_ref[...])
    h2_ref[...] = jnp.maximum(h2, 0.0).astype(jnp.bfloat16)   # bf16 scratch store

    # Linear 3 -> X_DIM = 448 columns written straight to the output block.
    y = (jnp.dot(h2_ref[...], w3_ref[...],
                 preferred_element_type=jnp.float32) + b3_ref[...])
    y_ref[...] = y.astype(y_ref.dtype)


def decoder_forward(z, c, params, *, tb=512, out_dtype=jnp.float32):
    """z: (B, Z_DIM) f32, c: (B, C_DIM) f32 -> y: (B, X_DIM) out_dtype."""
    w1z, w1c, b1, w2, b2, w3, b3 = params
    B = z.shape[0]
    TB = _choose_tb(B, tb)               # batch rows per grid step
    grid = (pl.cdiv(B, TB),)

    def full(arr):  # whole-array block, constant index_map -> resident in VMEM
        return pl.BlockSpec(arr.shape, lambda i, nd=arr.ndim: (0,) * nd)

    return pl.pallas_call(
        _decoder_kernel,
        out_shape=jax.ShapeDtypeStruct((B, X_DIM), out_dtype),
        grid=grid,
        in_specs=[
            pl.BlockSpec((TB, Z_DIM), lambda i: (i, 0)),
            pl.BlockSpec((TB, C_DIM), lambda i: (i, 0)),
            full(w1z), full(w1c), full(b1),
            full(w2), full(b2),
            full(w3), full(b3),
        ],
        out_specs=pl.BlockSpec((TB, X_DIM), lambda i: (i, 0)),
        scratch_shapes=[pltpu.VMEM((TB, H_P_DIM), jnp.bfloat16),
                        pltpu.VMEM((TB, H_P_DIM), jnp.bfloat16)],
        compiler_params=pltpu.CompilerParams(
            dimension_semantics=("parallel",)),
    )(z, c, w1z, w1c, b1, w2, b2, w3, b3)


def init_params(key):
    """Deterministic init mirroring PyTorch nn.Linear default (U[-1/sqrt(fan_in), +]).

    Weights are stored transposed (in, out) in bfloat16; biases stay f32.
    W1 is split at the z/c concat boundary; W3/b3 keep their true 448 columns.
    """
    def linear(k, fan_in, fan_out):
        kw, kb = jax.random.split(k)
        bound = float(fan_in) ** -0.5
        w = jax.random.uniform(kw, (fan_in, fan_out), jnp.float32, -bound, bound)
        b = jax.random.uniform(kb, (1, fan_out), jnp.float32, -bound, bound)
        return w, b

    k1, k2, k3 = jax.random.split(key, 3)
    w1, b1 = linear(k1, IN_DIM, H_P_DIM)
    w2, b2 = linear(k2, H_P_DIM, H_P_DIM)
    w3, b3 = linear(k3, H_P_DIM, X_DIM)

    w1z, w1c = w1[:Z_DIM], w1[Z_DIM:]

    bf16 = jnp.bfloat16
    return (w1z.astype(bf16), w1c.astype(bf16), b1,
            w2.astype(bf16), b2,
            w3.astype(bf16), b3)


def decoder_reference(z, c, params):
    """Pure-JAX reference mirroring the kernel's precision recipe.

    bf16 operands, f32 accumulation, bf16 intermediates -- this validates the
    kernel against its own numerics. Parity with an f32 PyTorch module would
    require keeping the weights in f32 end-to-end.
    """
    w1z, w1c, b1, w2, b2, w3, b3 = params
    f32 = jnp.float32

    def dot(a, b):
        return jnp.dot(a.astype(f32), b.astype(f32),
                       precision=jax.lax.Precision.HIGHEST)

    zb = z.astype(jnp.bfloat16)
    cb = c.astype(jnp.bfloat16)
    h1 = jnp.maximum(dot(zb, w1z) + dot(cb, w1c) + b1, 0.0).astype(jnp.bfloat16)
    h2 = jnp.maximum(dot(h1, w2) + b2, 0.0).astype(jnp.bfloat16)
    return dot(h2, w3) + b3


if __name__ == "__main__":
    key = jax.random.PRNGKey(0)
    kp, kz, kc = jax.random.split(key, 3)

    params = init_params(kp)

    # Small deterministic test (single batch tile).
    B = 8
    z = jax.random.normal(kz, (B, Z_DIM), jnp.float32)
    c = jax.random.normal(kc, (B, C_DIM), jnp.float32)

    y = jax.block_until_ready(decoder_forward(z, c, params))
    y_ref = decoder_reference(z, c, params)
    assert y.shape == (B, X_DIM), y.shape
    assert jnp.allclose(y, y_ref, atol=2e-2, rtol=2e-2), "mismatch vs reference (B=8)"

    # Multi-tile test: balanced grid=(2,) (B=300 -> TB=152) with a partial tile.
    B2 = 300
    z2 = jax.random.normal(jax.random.fold_in(kz, 1), (B2, Z_DIM), jnp.float32)
    c2 = jax.random.normal(jax.random.fold_in(kc, 1), (B2, C_DIM), jnp.float32)
    y2 = jax.block_until_ready(decoder_forward(z2, c2, params))
    y2_ref = decoder_reference(z2, c2, params)
    assert y2.shape == (B2, X_DIM), y2.shape
    assert jnp.allclose(y2, y2_ref, atol=2e-2, rtol=2e-2), "mismatch vs reference (B=300)"

    print("KERNEL_OK")
</pallas_src>

<mosaic_0001>
module attributes {stable_mosaic.version = 11 : i64} {
  func.func @_decoder_kernel(%arg0: i32, %arg1: memref<8x32xf32, #tpu.memory_space<vmem>>, %arg2: memref<8x14xf32, #tpu.memory_space<vmem>>, %arg3: memref<32x512xbf16, #tpu.memory_space<vmem>>, %arg4: memref<14x512xbf16, #tpu.memory_space<vmem>>, %arg5: memref<1x512xf32, #tpu.memory_space<vmem>>, %arg6: memref<512x512xbf16, #tpu.memory_space<vmem>>, %arg7: memref<1x512xf32, #tpu.memory_space<vmem>>, %arg8: memref<512x448xbf16, #tpu.memory_space<vmem>>, %arg9: memref<1x448xf32, #tpu.memory_space<vmem>>, %arg10: memref<8x448xf32, #tpu.memory_space<vmem>>, %arg11: memref<8x512xbf16, #tpu.memory_space<vmem>>, %arg12: memref<8x512xbf16, #tpu.memory_space<vmem>>) attributes {dimension_semantics = [#tpu.dimension_semantics<parallel>], iteration_bounds = array<i64: 1>, scalar_prefetch = 0 : i64, scratch_operands = 2 : i64, tpu.core_type = #tpu.core_type<tc>, window_params = [{transform_indices = @transform_0, window_bounds = array<i64: 8, 32>}, {transform_indices = @transform_1, window_bounds = array<i64: 8, 14>}, {pipeline_mode = #tpu.pipeline_mode<synchronous>, transform_indices = @transform_2, window_bounds = array<i64: 32, 512>}, {pipeline_mode = #tpu.pipeline_mode<synchronous>, transform_indices = @transform_3, window_bounds = array<i64: 14, 512>}, {pipeline_mode = #tpu.pipeline_mode<synchronous>, transform_indices = @transform_4, window_bounds = array<i64: 1, 512>}, {pipeline_mode = #tpu.pipeline_mode<synchronous>, transform_indices = @transform_5, window_bounds = array<i64: 512, 512>}, {pipeline_mode = #tpu.pipeline_mode<synchronous>, transform_indices = @transform_6, window_bounds = array<i64: 1, 512>}, {pipeline_mode = #tpu.pipeline_mode<synchronous>, transform_indices = @transform_7, window_bounds = array<i64: 512, 448>}, {pipeline_mode = #tpu.pipeline_mode<synchronous>, transform_indices = @transform_8, window_bounds = array<i64: 1, 448>}, {transform_indices = @transform_9, window_bounds = array<i64: 8, 448>}]} {
    %c0 = arith.constant 0 : index
    %c0_0 = arith.constant 0 : index
    %0 = vector.load %arg1[%c0, %c0_0] : memref<8x32xf32, #tpu.memory_space<vmem>>, vector<8x32xf32>
    %1 = arith.truncf %0 : vector<8x32xf32> to vector<8x32xbf16>
    %c0_1 = arith.constant 0 : index
    %c0_2 = arith.constant 0 : index
    %2 = vector.load %arg2[%c0_1, %c0_2] : memref<8x14xf32, #tpu.memory_space<vmem>>, vector<8x14xf32>
    %3 = arith.truncf %2 : vector<8x14xf32> to vector<8x14xbf16>
    %c0_3 = arith.constant 0 : index
    %c0_4 = arith.constant 0 : index
    %4 = vector.load %arg3[%c0_3, %c0_4] : memref<32x512xbf16, #tpu.memory_space<vmem>>, vector<32x512xbf16>
    %cst = arith.constant dense<0.000000e+00> : vector<8x512xf32>
    %5 = tpu.matmul %1, %4, %cst {dimension_numbers = #tpu.dot_dimension_numbers<[1], [0], [0], [1], [0, 0, 1, 1], [], []>} : vector<8x32xbf16>, vector<32x512xbf16>, vector<8x512xf32> -> vector<8x512xf32>
    %c0_5 = arith.constant 0 : index
    %c0_6 = arith.constant 0 : index
    %6 = vector.load %arg4[%c0_5, %c0_6] : memref<14x512xbf16, #tpu.memory_space<vmem>>, vector<14x512xbf16>
    %cst_7 = arith.constant dense<0.000000e+00> : vector<8x512xf32>
    %7 = tpu.matmul %3, %6, %cst_7 {dimension_numbers = #tpu.dot_dimension_numbers<[1], [0], [0], [1], [0, 0, 1, 1], [], []>} : vector<8x14xbf16>, vector<14x512xbf16>, vector<8x512xf32> -> vector<8x512xf32>
    %8 = arith.addf %5, %7 : vector<8x512xf32>
    %c0_8 = arith.constant 0 : index
    %c0_9 = arith.constant 0 : index
    %9 = vector.load %arg5[%c0_8, %c0_9] : memref<1x512xf32, #tpu.memory_space<vmem>>, vector<1x512xf32>
    %10 = vector.broadcast %9 : vector<1x512xf32> to vector<8x512xf32>
    %11 = arith.addf %8, %10 : vector<8x512xf32>
    %cst_10 = arith.constant 0.000000e+00 : f32
    %12 = vector.broadcast %cst_10 : f32 to vector<8x512xf32>
    %13 = arith.maximumf %11, %12 : vector<8x512xf32>
    %14 = arith.truncf %13 : vector<8x512xf32> to vector<8x512xbf16>
    %c0_11 = arith.constant 0 : index
    %c0_12 = arith.constant 0 : index
    %15 = vector.load %arg11[%c0_11, %c0_12] : memref<8x512xbf16, #tpu.memory_space<vmem>>, vector<8x512xbf16>
    tpu.vector_store %arg11[%c0_11, %c0_12], %14 {strides = array<i32>} : memref<8x512xbf16, #tpu.memory_space<vmem>>, vector<8x512xbf16>,
    %c0_13 = arith.constant 0 : index
    %c0_14 = arith.constant 0 : index
    %16 = vector.load %arg11[%c0_13, %c0_14] : memref<8x512xbf16, #tpu.memory_space<vmem>>, vector<8x512xbf16>
    %c0_15 = arith.constant 0 : index
    %c0_16 = arith.constant 0 : index
    %17 = vector.load %arg6[%c0_15, %c0_16] : memref<512x512xbf16, #tpu.memory_space<vmem>>, vector<512x512xbf16>
    %cst_17 = arith.constant dense<0.000000e+00> : vector<8x512xf32>
    %18 = tpu.matmul %16, %17, %cst_17 {dimension_numbers = #tpu.dot_dimension_numbers<[1], [0], [0], [1], [0, 0, 1, 1], [], []>} : vector<8x512xbf16>, vector<512x512xbf16>, vector<8x512xf32> -> vector<8x512xf32>
    %c0_18 = arith.constant 0 : index
    %c0_19 = arith.constant 0 : index
    %19 = vector.load %arg7[%c0_18, %c0_19] : memref<1x512xf32, #tpu.memory_space<vmem>>, vector<1x512xf32>
    %20 = vector.broadcast %19 : vector<1x512xf32> to vector<8x512xf32>
    %21 = arith.addf %18, %20 : vector<8x512xf32>
    %cst_20 = arith.constant 0.000000e+00 : f32
    %22 = vector.broadcast %cst_20 : f32 to vector<8x512xf32>
    %23 = arith.maximumf %21, %22 : vector<8x512xf32>
    %24 = arith.truncf %23 : vector<8x512xf32> to vector<8x512xbf16>
    %c0_21 = arith.constant 0 : index
    %c0_22 = arith.constant 0 : index
    %25 = vector.load %arg12[%c0_21, %c0_22] : memref<8x512xbf16, #tpu.memory_space<vmem>>, vector<8x512xbf16>
    tpu.vector_store %arg12[%c0_21, %c0_22], %24 {strides = array<i32>} : memref<8x512xbf16, #tpu.memory_space<vmem>>, vector<8x512xbf16>,
    %c0_23 = arith.constant 0 : index
    %c0_24 = arith.constant 0 : index
    %26 = vector.load %arg12[%c0_23, %c0_24] : memref<8x512xbf16, #tpu.memory_space<vmem>>, vector<8x512xbf16>
    %c0_25 = arith.constant 0 : index
    %c0_26 = arith.constant 0 : index
    %27 = vector.load %arg8[%c0_25, %c0_26] : memref<512x448xbf16, #tpu.memory_space<vmem>>, vector<512x448xbf16>
    %cst_27 = arith.constant dense<0.000000e+00> : vector<8x448xf32>
    %28 = tpu.matmul %26, %27, %cst_27 {dimension_numbers = #tpu.dot_dimension_numbers<[1], [0], [0], [1], [0, 0, 1, 1], [], []>} : vector<8x512xbf16>, vector<512x448xbf16>, vector<8x448xf32> -> vector<8x448xf32>
    %c0_28 = arith.constant 0 : index
    %c0_29 = arith.constant 0 : index
    %29 = vector.load %arg9[%c0_28, %c0_29] : memref<1x448xf32, #tpu.memory_space<vmem>>, vector<1x448xf32>
    %30 = vector.broadcast %29 : vector<1x448xf32> to vector<8x448xf32>
    %31 = arith.addf %28, %30 : vector<8x448xf32>
    %c0_30 = arith.constant 0 : index
    %c0_31 = arith.constant 0 : index
    %32 = vector.load %arg10[%c0_30, %c0_31] : memref<8x448xf32, #tpu.memory_space<vmem>>, vector<8x448xf32>
    tpu.vector_store %arg10[%c0_30, %c0_31], %31 {strides = array<i32>} : memref<8x448xf32, #tpu.memory_space<vmem>>, vector<8x448xf32>,
    return
  }
  func.func @transform_0(%arg0: i32) -> (i32, i32) {
    %c0_i32 = arith.constant 0 : i32
    %c0_i32_0 = arith.constant 0 : i32
    return %arg0, %c0_i32 : i32, i32
  }
  func.func @transform_1(%arg0: i32) -> (i32, i32) {
    %c0_i32 = arith.constant 0 : i32
    %c0_i32_0 = arith.constant 0 : i32
    return %arg0, %c0_i32 : i32, i32
  }
  func.func @transform_2(%arg0: i32) -> (i32, i32) {
    %c0_i32 = arith.constant 0 : i32
    %c0_i32_0 = arith.constant 0 : i32
    %c0_i32_1 = arith.constant 0 : i32
    return %c0_i32, %c0_i32_0 : i32, i32
  }
  func.func @transform_3(%arg0: i32) -> (i32, i32) {
    %c0_i32 = arith.constant 0 : i32
    %c0_i32_0 = arith.constant 0 : i32
    %c0_i32_1 = arith.constant 0 : i32
    return %c0_i32, %c0_i32_0 : i32, i32
  }
  func.func @transform_4(%arg0: i32) -> (i32, i32) {
    %c0_i32 = arith.constant 0 : i32
    %c0_i32_0 = arith.constant 0 : i32
    %c0_i32_1 = arith.constant 0 : i32
    return %c0_i32, %c0_i32_0 : i32, i32
  }
  func.func @transform_5(%arg0: i32) -> (i32, i32) {
    %c0_i32 = arith.constant 0 : i32
    %c0_i32_0 = arith.constant 0 : i32
    %c0_i32_1 = arith.constant 0 : i32
    return %c0_i32, %c0_i32_0 : i32, i32
  }
  func.func @transform_6(%arg0: i32) -> (i32, i32) {
    %c0_i32 = arith.constant 0 : i32
    %c0_i32_0 = arith.constant 0 : i32
    %c0_i32_1 = arith.constant 0 : i32
    return %c0_i32, %c0_i32_0 : i32, i32
  }
  func.func @transform_7(%arg0: i32) -> (i32, i32) {
    %c0_i32 = arith.constant 0 : i32
    %c0_i32_0 = arith.constant 0 : i32
    %c0_i32_1 = arith.constant 0 : i32
    return %c0_i32, %c0_i32_0 : i32, i32
  }
  func.func @transform_8(%arg0: i32) -> (i32, i32) {
    %c0_i32 = arith.constant 0 : i32
    %c0_i32_0 = arith.constant 0 : i32
    %c0_i32_1 = arith.constant 0 : i32
    return %c0_i32, %c0_i32_0 : i32, i32
  }
  func.func @transform_9(%arg0: i32) -> (i32, i32) {
    %c0_i32 = arith.constant 0 : i32
    %c0_i32_0 = arith.constant 0 : i32
    return %arg0, %c0_i32 : i32, i32
  }
}

</mosaic_0001>

<llo_original>
// kernel: tpu_custom_call.1
$region0: #{tpu_custom_call.1}
  #allocation0 [shape = 'u32[]', space=smem, size = 0x4, offset = 0x4, fixed_abs, tag = 'smem constant byte address 0x4 - core index']
  #allocation1 [shape = 'u32[144,128]{1,0:T(1,128)}', space=vmem, size = 0x12000, scoped, tag = 'internal scratch']
  #allocation2 [shape = 'bf16[8,512]{1,0:T(8,128)(2,1)}', space=vmem, size = 0x2000, scoped, tag = 'scratch operand']
  #allocation3 [shape = 'bf16[8,512]{1,0:T(8,128)(2,1)}', space=vmem, size = 0x2000, scoped, tag = 'scratch operand']
  %s0 = inlined_call_operand.vmem [shape: f32[8,32], index: 0, kind: input, shape index: {}]
  %s1 = inlined_call_operand.vmem [shape: f32[8,14], index: 1, kind: input, shape index: {}]
  %s2 = inlined_call_operand.vmem [shape: bf16[32,512], index: 2, kind: input, shape index: {}]
  %s3 = inlined_call_operand.vmem [shape: bf16[14,512], index: 3, kind: input, shape index: {}]
  %s4 = inlined_call_operand.vmem [shape: f32[1,512], index: 4, kind: input, shape index: {}]
  %s5 = inlined_call_operand.vmem [shape: bf16[512,512], index: 5, kind: input, shape index: {}]
  %s6 = inlined_call_operand.vmem [shape: f32[1,512], index: 6, kind: input, shape index: {}]
  %s7 = inlined_call_operand.vmem [shape: bf16[512,448], index: 7, kind: input, shape index: {}]
  %s8 = inlined_call_operand.vmem [shape: f32[1,448], index: 8, kind: input, shape index: {}]
  %s9 = inlined_call_operand.hbm [shape: f32[8,448], index: 9, kind: output, shape index: {}]
  %s10 = sld [smem:[#allocation0]]
  $region46: #{tpu_custom_call.1} parent=0
    _
  %s12 = ssub.s32 1, %s10
  %s13 = scalar_select 0, %s12, %s10
  $region1: #{tpu_custom_call.1} parent=0
    #allocation4 [shape = 'u8[16384]{0}', space=vmem, size = 0x4000, scoped, tag = 'output window, operand 0, single buffered']
    #allocation5 [shape = 's32[1]{0}', space=sflag, size = 0x4, scoped, tag = 'scoped memory for tpu_custom_call.1']
    %14 = vsyncpa [#allocation5], 0
    // Predicated region
    $region2: #{tpu_custom_call.1} parent=1 // pred_check
      _
    $region3: #{tpu_custom_call.1} parent=1 // pred_check_branch
      %16 = sbr.rel (0) target = $region5
    $region4: #{tpu_custom_call.1} parent=1 // pred_region
      _
    $region5: #{tpu_custom_call.1} parent=1 // pred_fallthru
      _
    // Predicated region
    $region6: #{tpu_custom_call.1} parent=1 // pred_check
      _
    $region7: #{tpu_custom_call.1} parent=1 // pred_check_branch
      %18 = sbr.rel (0) target = $region9
    $region8: #{tpu_custom_call.1} parent=1 // pred_region
      _
    $region9: #{tpu_custom_call.1} parent=1 // pred_fallthru
      _
    // Predicated region
    $region10: #{tpu_custom_call.1} parent=1 // pred_check
      _
    $region11: #{tpu_custom_call.1} parent=1 // pred_check_branch
      %20 = sbr.rel (0) target = $region13
    $region12: #{tpu_custom_call.1} parent=1 // pred_region
      _
    $region13: #{tpu_custom_call.1} parent=1 // pred_fallthru
      _
    // Predicated region
    $region14: #{tpu_custom_call.1} parent=1 // pred_check
      _
    $region15: #{tpu_custom_call.1} parent=1 // pred_check_branch
      %22 = sbr.rel (0) target = $region17
    $region16: #{tpu_custom_call.1} parent=1 // pred_region
      _
    $region17: #{tpu_custom_call.1} parent=1 // pred_fallthru
      _
    // Predicated region
    $region18: #{tpu_custom_call.1} parent=1 // pred_check
      _
    $region19: #{tpu_custom_call.1} parent=1 // pred_check_branch
      %24 = sbr.rel (0) target = $region21
    $region20: #{tpu_custom_call.1} parent=1 // pred_region
      _
    $region21: #{tpu_custom_call.1} parent=1 // pred_fallthru
      _
    // Predicated region
    $region22: #{tpu_custom_call.1} parent=1 // pred_check
      _
    $region23: #{tpu_custom_call.1} parent=1 // pred_check_branch
      %26 = sbr.rel (0) target = $region25
    $region24: #{tpu_custom_call.1} parent=1 // pred_region
      _
    $region25: #{tpu_custom_call.1} parent=1 // pred_fallthru
      _
    // Predicated region
    $region26: #{tpu_custom_call.1} parent=1 // pred_check
      _
    $region27: #{tpu_custom_call.1} parent=1 // pred_check_branch
      %28 = sbr.rel (0) target = $region29
    $region28: #{tpu_custom_call.1} parent=1 // pred_region
      _
    $region29: #{tpu_custom_call.1} parent=1 // pred_fallthru
      _
    // Predicated region
    $region30: #{tpu_custom_call.1} parent=1 // pred_check
      _
    $region31: #{tpu_custom_call.1} parent=1 // pred_check_branch
      %30 = sbr.rel (0) target = $region33
    $region32: #{tpu_custom_call.1} parent=1 // pred_region
      _
    $region33: #{tpu_custom_call.1} parent=1 // pred_fallthru
      _
    // Predicated region
    $region34: #{tpu_custom_call.1} parent=1 // pred_check
      _
    $region35: #{tpu_custom_call.1} parent=1 // pred_check_branch
      %32 = sbr.rel (0) target = $region37
    $region36: #{tpu_custom_call.1} parent=1 // pred_region
      _
    $region37: #{tpu_custom_call.1} parent=1 // pred_fallthru
      _
    %v34 = vld [vmem:[%s0] sm:$0xff]
    %v35 = vpack.c.bf16 %v34, %v34
    %v36 = vld [vmem:[%s1] sm:$0xff]
    %v37 = vpack.c.bf16 %v36, %v36
    %v38 = vld [vmem:[%s2] sm:$0xff]
    %v39 = vld [vmem:[%s2 + $0x8] sm:$0xff]
    %v40 = vld [vmem:[%s2 + $0x10] sm:$0xff]
    %v41 = vld [vmem:[%s2 + $0x18] sm:$0xff]
    %v42 = vld [vmem:[%s2 + $0x20] sm:$0xff]
    %v43 = vld [vmem:[%s2 + $0x28] sm:$0xff]
    %v44 = vld [vmem:[%s2 + $0x30] sm:$0xff]
    %v45 = vld [vmem:[%s2 + $0x38] sm:$0xff]
    %v46 = vld [vmem:[%s3] sm:$0xff]
    %v47 = vld [vmem:[%s3 + $0x8] sm:$0xff]
    %v48 = vld [vmem:[%s3 + $0x10] sm:$0x77]
    %v49 = vld [vmem:[%s3 + $0x18] sm:$0x77]
    %v54 = vunpack.c.l.b16 %v46
    %v55 = vunpack.c.h.b16 %v46
    %v56 = vunpack.c.l.b16 %v47
    %v57 = vunpack.c.h.b16 %v47
    %v58 = vunpack.c.l.b16 %v48
    %v59 = vunpack.c.h.b16 %v48
    %v60 = vunpack.c.l.b16 %v49
    %v61 = vunpack.c.h.b16 %v49
    %v62 = vpack.c.b16 %v58, %v54
    %v63 = vpack.c.b16 %v59, %v55
    %v64 = vpack.c.b16 %v60, %v56
    %v65 = vpack.c.b16 %v61, %v57
    %vm66 = vcmask 113664
    %v68 = vsel %vm66, %v37, 0
    %vm70 = vcmask 1046528
    %v72 = vsel %vm70, %v62, 0
    %v75 = vsel %vm70, %v63, 0
    %v78 = vsel %vm70, %v64, 0
    %v81 = vsel %vm70, %v65, 0
    %83 = vmatprep.subr.bf16.mxu0 %v75
    %84 = vmatpush1.bf16.msra.mxu0 %v72
    %85 = vmatprep.subr.bf16.mxu0 0
    %86 = vmatpush1.bf16.msra.mxu0 0
    %87 = vmatprep.subr.bf16.mxu0 0
    %88 = vmatpush1.bf16.msra.mxu0 0
    %89 = vmatprep.subr.bf16.mxu0 0
    %90 = vmatpush1.bf16.msra.mxu0 0
    %91 = vmatprep.subr.bf16.mxu0 0
    %92 = vmatpush1.bf16.msra.mxu0 0
    %93 = vmatprep.subr.bf16.mxu0 0
    %94 = vmatpush1.bf16.msra.mxu0 0
    %95 = vmatprep.subr.bf16.mxu0 0
    %96 = vmatpush1.bf16.msra.mxu0 0
    %97 = vmatprep.subr.bf16.mxu0 0
    %98 = vmatpush1.bf16.msra.mxu0 0
    %99 = vmatprep.subr.bf16.mxu0 0
    %100 = vmatpush1.bf16.msra.mxu0 0
    %101 = vmatprep.subr.bf16.mxu0 0
    %102 = vmatpush1.bf16.msra.mxu0 0
    %103 = vmatprep.subr.bf16.mxu0 0
    %104 = vmatpush1.bf16.msra.mxu0 0
    %105 = vmatprep.subr.bf16.mxu0 0
    %106 = vmatpush1.bf16.msra.mxu0 0
    %107 = vmatprep.subr.bf16.mxu0 0
    %108 = vmatpush1.bf16.msra.mxu0 0
    %109 = vmatprep.subr.bf16.mxu0 0
    %110 = vmatpush1.bf16.msra.mxu0 0
    %111 = vmatprep.subr.bf16.mxu0 0
    %112 = vmatpush1.bf16.msra.mxu0 0
    %113 = vmatprep.subr.bf16.mxu0 0
    %114 = vmatpush1.bf16.msra.mxu0 0
    %115 = vmatprep.mubr.bf16.mxu0 0
    %116 = vmatmul.mubr.bf16.gmra.mrb[0].mxu0 %v68
    %v117 = vpop.f32.mrb[0].mxu0
    %v118 = vadd.f32 0.0, %v117
    %v119 = vpop.f32.mrb[0].mxu0
    %v120 = vadd.f32 0.0, %v119
    %v121 = vpop.f32.mrb[0].mxu0
    %v122 = vpop.f32.mrb[0].mxu0
    %123 = vdwg.mxu0
    %124 = vmatprep.subr.bf16.mxu0 %v81
    %125 = vmatpush1.bf16.msra.mxu0 %v78
    %126 = vmatprep.subr.bf16.mxu0 0
    %127 = vmatpush1.bf16.msra.mxu0 0
    %128 = vmatprep.subr.bf16.mxu0 0
    %129 = vmatpush1.bf16.msra.mxu0 0
    %130 = vmatprep.subr.bf16.mxu0 0
    %131 = vmatpush1.bf16.msra.mxu0 0
    %132 = vmatprep.subr.bf16.mxu0 0
    %133 = vmatpush1.bf16.msra.mxu0 0
    %134 = vmatprep.subr.bf16.mxu0 0
    %135 = vmatpush1.bf16.msra.mxu0 0
    %136 = vmatprep.subr.bf16.mxu0 0
    %137 = vmatpush1.bf16.msra.mxu0 0
    %138 = vmatprep.subr.bf16.mxu0 0
    %139 = vmatpush1.bf16.msra.mxu0 0
    %140 = vmatprep.subr.bf16.mxu0 0
    %141 = vmatpush1.bf16.msra.mxu0 0
    %142 = vmatprep.subr.bf16.mxu0 0
    %143 = vmatpush1.bf16.msra.mxu0 0
    %144 = vmatprep.subr.bf16.mxu0 0
    %145 = vmatpush1.bf16.msra.mxu0 0
    %146 = vmatprep.subr.bf16.mxu0 0
    %147 = vmatpush1.bf16.msra.mxu0 0
    %148 = vmatprep.subr.bf16.mxu0 0
    %149 = vmatpush1.bf16.msra.mxu0 0
    %150 = vmatprep.subr.bf16.mxu0 0
    %151 = vmatpush1.bf16.msra.mxu0 0
    %152 = vmatprep.subr.bf16.mxu0 0
    %153 = vmatpush1.bf16.msra.mxu0 0
    %154 = vmatprep.subr.bf16.mxu0 0
    %155 = vmatpush1.bf16.msra.mxu0 0
    %156 = vmatprep.mubr.bf16.mxu0 0
    %157 = vmatmul.mubr.bf16.gmra.mrb[0].mxu0 %v68
    %v158 = vpop.f32.mrb[0].mxu0
    %v159 = vadd.f32 0.0, %v158
    %v160 = vpop.f32.mrb[0].mxu0
    %v161 = vadd.f32 0.0, %v160
    %v162 = vpop.f32.mrb[0].mxu0
    %v163 = vpop.f32.mrb[0].mxu0
    %164 = vdwg.mxu0
    %v173 = vunpack.c.l.b16 %v38
    %v174 = vunpack.c.h.b16 %v38
    %v175 = vunpack.c.l.b16 %v39
    %v176 = vunpack.c.h.b16 %v39
    %v177 = vunpack.c.l.b16 %v40
    %v178 = vunpack.c.h.b16 %v40
    %v179 = vunpack.c.l.b16 %v41
    %v180 = vunpack.c.h.b16 %v41
    %v181 = vunpack.c.l.b16 %v42
    %v182 = vunpack.c.h.b16 %v42
    %v183 = vunpack.c.l.b16 %v43
    %v184 = vunpack.c.h.b16 %v43
    %v185 = vunpack.c.l.b16 %v44
    %v186 = vunpack.c.h.b16 %v44
    %v187 = vunpack.c.l.b16 %v45
    %v188 = vunpack.c.h.b16 %v45
    %v189 = vpack.c.b16 %v177, %v173
    %v190 = vpack.c.b16 %v178, %v174
    %v191 = vpack.c.b16 %v179, %v175
    %v192 = vpack.c.b16 %v180, %v176
    %v193 = vpack.c.b16 %v185, %v181
    %v194 = vpack.c.b16 %v186, %v182
    %v195 = vpack.c.b16 %v187, %v183
    %v196 = vpack.c.b16 %v188, %v184
    %vm205 = vcmask 261120
    %v207 = vsel %vm205, %v35, 0
    %209 = vmatprep.subr.bf16.mxu0 %v190
    %210 = vmatpush1.bf16.msra.mxu0 %v189
    %211 = vmatprep.subr.bf16.mxu0 %v194
    %212 = vmatpush1.bf16.msra.mxu0 %v193
    %213 = vmatprep.subr.bf16.mxu0 0
    %214 = vmatpush1.bf16.msra.mxu0 0
    %215 = vmatprep.subr.bf16.mxu0 0
    %216 = vmatpush1.bf16.msra.mxu0 0
    %217 = vmatprep.subr.bf16.mxu0 0
    %218 = vmatpush1.bf16.msra.mxu0 0
    %219 = vmatprep.subr.bf16.mxu0 0
    %220 = vmatpush1.bf16.msra.mxu0 0
    %221 = vmatprep.subr.bf16.mxu0 0
    %222 = vmatpush1.bf16.msra.mxu0 0
    %223 = vmatprep.subr.bf16.mxu0 0
    %224 = vmatpush1.bf16.msra.mxu0 0
    %225 = vmatprep.subr.bf16.mxu0 0
    %226 = vmatpush1.bf16.msra.mxu0 0
    %227 = vmatprep.subr.bf16.mxu0 0
    %228 = vmatpush1.bf16.msra.mxu0 0
    %229 = vmatprep.subr.bf16.mxu0 0
    %230 = vmatpush1.bf16.msra.mxu0 0
    %231 = vmatprep.subr.bf16.mxu0 0
    %232 = vmatpush1.bf16.msra.mxu0 0
    %233 = vmatprep.subr.bf16.mxu0 0
    %234 = vmatpush1.bf16.msra.mxu0 0
    %235 = vmatprep.subr.bf16.mxu0 0
    %236 = vmatpush1.bf16.msra.mxu0 0
    %237 = vmatprep.subr.bf16.mxu0 0
    %238 = vmatpush1.bf16.msra.mxu0 0
    %239 = vmatprep.subr.bf16.mxu0 0
    %240 = vmatpush1.bf16.msra.mxu0 0
    %241 = vmatprep.mubr.bf16.mxu0 0
    %242 = vmatmul.mubr.bf16.gmra.mrb[0].mxu0 %v207
    %v243 = vpop.f32.mrb[0].mxu0
    %v244 = vadd.f32 %v118, %v243
    %v245 = vpop.f32.mrb[0].mxu0
    %v246 = vadd.f32 %v120, %v245
    %v247 = vpop.f32.mrb[0].mxu0
    %v248 = vpop.f32.mrb[0].mxu0
    %249 = vdwg.mxu0
    %250 = vmatprep.subr.bf16.mxu0 %v192
    %251 = vmatpush1.bf16.msra.mxu0 %v191
    %252 = vmatprep.subr.bf16.mxu0 %v196
    %253 = vmatpush1.bf16.msra.mxu0 %v195
    %254 = vmatprep.subr.bf16.mxu0 0
    %255 = vmatpush1.bf16.msra.mxu0 0
    %256 = vmatprep.subr.bf16.mxu0 0
    %257 = vmatpush1.bf16.msra.mxu0 0
    %258 = vmatprep.subr.bf16.mxu0 0
    %259 = vmatpush1.bf16.msra.mxu0 0
    %260 = vmatprep.subr.bf16.mxu0 0
    %261 = vmatpush1.bf16.msra.mxu0 0
    %262 = vmatprep.subr.bf16.mxu0 0
    %263 = vmatpush1.bf16.msra.mxu0 0
    %264 = vmatprep.subr.bf16.mxu0 0
    %265 = vmatpush1.bf16.msra.mxu0 0
    %266 = vmatprep.subr.bf16.mxu0 0
    %267 = vmatpush1.bf16.msra.mxu0 0
    %268 = vmatprep.subr.bf16.mxu0 0
    %269 = vmatpush1.bf16.msra.mxu0 0
    %270 = vmatprep.subr.bf16.mxu0 0
    %271 = vmatpush1.bf16.msra.mxu0 0
    %272 = vmatprep.subr.bf16.mxu0 0
    %273 = vmatpush1.bf16.msra.mxu0 0
    %274 = vmatprep.subr.bf16.mxu0 0
    %275 = vmatpush1.bf16.msra.mxu0 0
    %276 = vmatprep.subr.bf16.mxu0 0
    %277 = vmatpush1.bf16.msra.mxu0 0
    %278 = vmatprep.subr.bf16.mxu0 0
    %279 = vmatpush1.bf16.msra.mxu0 0
    %280 = vmatprep.subr.bf16.mxu0 0
    %281 = vmatpush1.bf16.msra.mxu0 0
    %282 = vmatprep.mubr.bf16.mxu0 0
    %283 = vmatmul.mubr.bf16.gmra.mrb[0].mxu0 %v207
    %v284 = vpop.f32.mrb[0].mxu0
    %v285 = vadd.f32 %v159, %v284
    %v286 = vpop.f32.mrb[0].mxu0
    %v287 = vadd.f32 %v161, %v286
    %v288 = vpop.f32.mrb[0].mxu0
    %v289 = vpop.f32.mrb[0].mxu0
    %290 = vdwg.mxu0
    %v291 = vld [vmem:[%s4] sm:$0xf]
    %v293 = vlaneseq
    %v294 = vshrl.u32 %v293, 7
    %v295 = vsub.s32 0, %v294
    %v296 = vrot.slane %v291, %v295
    %v297 = vlaneseq
    %v298 = vshrl.u32 %v297, 7
    %v299 = vsub.s32 1, %v298
    %v300 = vrot.slane %v291, %v299
    %v301 = vlaneseq
    %v302 = vshrl.u32 %v301, 7
    %v303 = vsub.s32 2, %v302
    %v304 = vrot.slane %v291, %v303
    %v305 = vlaneseq
    %v306 = vshrl.u32 %v305, 7
    %v307 = vsub.s32 3, %v306
    %v308 = vrot.slane %v291, %v307
    %v313 = vadd.f32 %v244, %v296
    %v314 = vadd.f32 %v246, %v300
    %v315 = vadd.f32 %v285, %v304
    %v316 = vadd.f32 %v287, %v308
    %v317 = vmax.f32 %v313, 0.0
    %v318 = vmax.f32 %v314, 0.0
    %v319 = vmax.f32 %v315, 0.0
    %v320 = vmax.f32 %v316, 0.0
    %v321 = vpack.c.bf16 %v317, %v317
    %v322 = vpack.c.bf16 %v318, %v318
    %v323 = vpack.c.bf16 %v319, %v319
    %v324 = vpack.c.bf16 %v320, %v320
    %v329 = vunpack.c.l.b16 %v321
    %v330 = vunpack.c.l.b16 %v322
    %v331 = vunpack.c.l.b16 %v323
    %v332 = vunpack.c.l.b16 %v324
    %v333 = vpack.c.b16 %v330, %v329
    %v334 = vpack.c.b16 %v332, %v331
    %337 = vst [vmem:[#allocation2] sm:$0xff] %v333
    %338 = vst [vmem:[#allocation2 + $0x8] sm:$0xff] %v334
    %v339 = vld [vmem:[#allocation2] sm:$0xff]
    %v340 = vld [vmem:[#allocation2 + $0x8] sm:$0xff]
    %v341 = vld [vmem:[%s5] sm:$0xff]
    %v342 = vld [vmem:[%s5 + $0x8] sm:$0xff]
    %v343 = vld [vmem:[%s5 + $0x10] sm:$0xff]
    %v344 = vld [vmem:[%s5 + $0x18] sm:$0xff]
    %v345 = vld [vmem:[%s5 + $0x20] sm:$0xff]
    %v346 = vld [vmem:[%s5 + $0x28] sm:$0xff]
    %v347 = vld [vmem:[%s5 + $0x30] sm:$0xff]
    %v348 = vld [vmem:[%s5 + $0x38] sm:$0xff]
    %v349 = vld [vmem:[%s5 + $0x40] sm:$0xff]
    %v350 = vld [vmem:[%s5 + $0x48] sm:$0xff]
    %v351 = vld [vmem:[%s5 + $0x50] sm:$0xff]
    %v352 = vld [vmem:[%s5 + $0x58] sm:$0xff]
    %v353 = vld [vmem:[%s5 + $0x60] sm:$0xff]
    %v354 = vld [vmem:[%s5 + $0x68] sm:$0xff]
    %v355 = vld [vmem:[%s5 + $0x70] sm:$0xff]
    %v356 = vld [vmem:[%s5 + $0x78] sm:$0xff]
    %v357 = vld [vmem:[%s5 + $0x80] sm:$0xff]
    %v358 = vld [vmem:[%s5 + $0x88] sm:$0xff]
    %v359 = vld [vmem:[%s5 + $0x90] sm:$0xff]
    %v360 = vld [vmem:[%s5 + $0x98] sm:$0xff]
    %v361 = vld [vmem:[%s5 + $0xa0] sm:$0xff]
    %v362 = vld [vmem:[%s5 + $0xa8] sm:$0xff]
    %v363 = vld [vmem:[%s5 + $0xb0] sm:$0xff]
    %v364 = vld [vmem:[%s5 + $0xb8] sm:$0xff]
    %v365 = vld [vmem:[%s5 + $0xc0] sm:$0xff]
    %v366 = vld [vmem:[%s5 + $0xc8] sm:$0xff]
    %v367 = vld [vmem:[%s5 + $0xd0] sm:$0xff]
    %v368 = vld [vmem:[%s5 + $0xd8] sm:$0xff]
    %v369 = vld [vmem:[%s5 + $0xe0] sm:$0xff]
    %v370 = vld [vmem:[%s5 + $0xe8] sm:$0xff]
    %v371 = vld [vmem:[%s5 + $0xf0] sm:$0xff]
    %v372 = vld [vmem:[%s5 + $0xf8] sm:$0xff]
    %v373 = vld [vmem:[%s5 + $0x100] sm:$0xff]
    %v374 = vld [vmem:[%s5 + $0x108] sm:$0xff]
    %v375 = vld [vmem:[%s5 + $0x110] sm:$0xff]
    %v376 = vld [vmem:[%s5 + $0x118] sm:$0xff]
    %v377 = vld [vmem:[%s5 + $0x120] sm:$0xff]
    %v378 = vld [vmem:[%s5 + $0x128] sm:$0xff]
    %v379 = vld [vmem:[%s5 + $0x130] sm:$0xff]
    %v380 = vld [vmem:[%s5 + $0x138] sm:$0xff]
    %v381 = vld [vmem:[%s5 + $0x140] sm:$0xff]
    %v382 = vld [vmem:[%s5 + $0x148] sm:$0xff]
    %v383 = vld [vmem:[%s5 + $0x150] sm:$0xff]
    %v384 = vld [vmem:[%s5 + $0x158] sm:$0xff]
    %v385 = vld [vmem:[%s5 + $0x160] sm:$0xff]
    %v386 = vld [vmem:[%s5 + $0x168] sm:$0xff]
    %v387 = vld [vmem:[%s5 + $0x170] sm:$0xff]
    %v388 = vld [vmem:[%s5 + $0x178] sm:$0xff]
    %v389 = vld [vmem:[%s5 + $0x180] sm:$0xff]
    %v390 = vld [vmem:[%s5 + $0x188] sm:$0xff]
    %v391 = vld [vmem:[%s5 + $0x190] sm:$0xff]
    %v392 = vld [vmem:[%s5 + $0x198] sm:$0xff]
    %v393 = vld [vmem:[%s5 + $0x1a0] sm:$0xff]
    %v394 = vld [vmem:[%s5 + $0x1a8] sm:$0xff]
    %v395 = vld [vmem:[%s5 + $0x1b0] sm:$0xff]
    %v396 = vld [vmem:[%s5 + $0x1b8] sm:$0xff]
    %v397 = vld [vmem:[%s5 + $0x1c0] sm:$0xff]
    %v398 = vld [vmem:[%s5 + $0x1c8] sm:$0xff]
    %v399 = vld [vmem:[%s5 + $0x1d0] sm:$0xff]
    %v400 = vld [vmem:[%s5 + $0x1d8] sm:$0xff]
    %v401 = vld [vmem:[%s5 + $0x1e0] sm:$0xff]
    %v402 = vld [vmem:[%s5 + $0x1e8] sm:$0xff]
    %v403 = vld [vmem:[%s5 + $0x1f0] sm:$0xff]
    %v404 = vld [vmem:[%s5 + $0x1f8] sm:$0xff]
    %v405 = vld [vmem:[%s5 + $0x200] sm:$0xff]
    %v406 = vld [vmem:[%s5 + $0x208] sm:$0xff]
    %v407 = vld [vmem:[%s5 + $0x210] sm:$0xff]
    %v408 = vld [vmem:[%s5 + $0x218] sm:$0xff]
    %v409 = vld [vmem:[%s5 + $0x220] sm:$0xff]
    %v410 = vld [vmem:[%s5 + $0x228] sm:$0xff]
    %v411 = vld [vmem:[%s5 + $0x230] sm:$0xff]
    %v412 = vld [vmem:[%s5 + $0x238] sm:$0xff]
    %v413 = vld [vmem:[%s5 + $0x240] sm:$0xff]
    %v414 = vld [vmem:[%s5 + $0x248] sm:$0xff]
    %v415 = vld [vmem:[%s5 + $0x250] sm:$0xff]
    %v416 = vld [vmem:[%s5 + $0x258] sm:$0xff]
    %v417 = vld [vmem:[%s5 + $0x260] sm:$0xff]
    %v418 = vld [vmem:[%s5 + $0x268] sm:$0xff]
    %v419 = vld [vmem:[%s5 + $0x270] sm:$0xff]
    %v420 = vld [vmem:[%s5 + $0x278] sm:$0xff]
    %v421 = vld [vmem:[%s5 + $0x280] sm:$0xff]
    %v422 = vld [vmem:[%s5 + $0x288] sm:$0xff]
    %v423 = vld [vmem:[%s5 + $0x290] sm:$0xff]
    %v424 = vld [vmem:[%s5 + $0x298] sm:$0xff]
    %v425 = vld [vmem:[%s5 + $0x2a0] sm:$0xff]
    %v426 = vld [vmem:[%s5 + $0x2a8] sm:$0xff]
    %v427 = vld [vmem:[%s5 + $0x2b0] sm:$0xff]
    %v428 = vld [vmem:[%s5 + $0x2b8] sm:$0xff]
    %v429 = vld [vmem:[%s5 + $0x2c0] sm:$0xff]
    %v430 = vld [vmem:[%s5 + $0x2c8] sm:$0xff]
    %v431 = vld [vmem:[%s5 + $0x2d0] sm:$0xff]
    %v432 = vld [vmem:[%s5 + $0x2d8] sm:$0xff]
    %v433 = vld [vmem:[%s5 + $0x2e0] sm:$0xff]
    %v434 = vld [vmem:[%s5 + $0x2e8] sm:$0xff]
    %v435 = vld [vmem:[%s5 + $0x2f0] sm:$0xff]
    %v436 = vld [vmem:[%s5 + $0x2f8] sm:$0xff]
    %v437 = vld [vmem:[%s5 + $0x300] sm:$0xff]
    %v438 = vld [vmem:[%s5 + $0x308] sm:$0xff]
    %v439 = vld [vmem:[%s5 + $0x310] sm:$0xff]
    %v440 = vld [vmem:[%s5 + $0x318] sm:$0xff]
    %v441 = vld [vmem:[%s5 + $0x320] sm:$0xff]
    %v442 = vld [vmem:[%s5 + $0x328] sm:$0xff]
    %v443 = vld [vmem:[%s5 + $0x330] sm:$0xff]
    %v444 = vld [vmem:[%s5 + $0x338] sm:$0xff]
    %v445 = vld [vmem:[%s5 + $0x340] sm:$0xff]
    %v446 = vld [vmem:[%s5 + $0x348] sm:$0xff]
    %v447 = vld [vmem:[%s5 + $0x350] sm:$0xff]
    %v448 = vld [vmem:[%s5 + $0x358] sm:$0xff]
    %v449 = vld [vmem:[%s5 + $0x360] sm:$0xff]
    %v450 = vld [vmem:[%s5 + $0x368] sm:$0xff]
    %v451 = vld [vmem:[%s5 + $0x370] sm:$0xff]
    %v452 = vld [vmem:[%s5 + $0x378] sm:$0xff]
    %v453 = vld [vmem:[%s5 + $0x380] sm:$0xff]
    %v454 = vld [vmem:[%s5 + $0x388] sm:$0xff]
    %v455 = vld [vmem:[%s5 + $0x390] sm:$0xff]
    %v456 = vld [vmem:[%s5 + $0x398] sm:$0xff]
    %v457 = vld [vmem:[%s5 + $0x3a0] sm:$0xff]
    %v458 = vld [vmem:[%s5 + $0x3a8] sm:$0xff]
    %v459 = vld [vmem:[%s5 + $0x3b0] sm:$0xff]
    %v460 = vld [vmem:[%s5 + $0x3b8] sm:$0xff]
    %v461 = vld [vmem:[%s5 + $0x3c0] sm:$0xff]
    %v462 = vld [vmem:[%s5 + $0x3c8] sm:$0xff]
    %v463 = vld [vmem:[%s5 + $0x3d0] sm:$0xff]
    %v464 = vld [vmem:[%s5 + $0x3d8] sm:$0xff]
    %v465 = vld [vmem:[%s5 + $0x3e0] sm:$0xff]
    %v466 = vld [vmem:[%s5 + $0x3e8] sm:$0xff]
    %v467 = vld [vmem:[%s5 + $0x3f0] sm:$0xff]
    %v468 = vld [vmem:[%s5 + $0x3f8] sm:$0xff]
    %v469 = vld [vmem:[%s6] sm:$0xf]
    %v471 = vlaneseq
    %v472 = vshrl.u32 %v471, 7
    %v473 = vsub.s32 0, %v472
    %v474 = vrot.slane %v469, %v473
    %v475 = vlaneseq
    %v476 = vshrl.u32 %v475, 7
    %v477 = vsub.s32 1, %v476
    %v478 = vrot.slane %v469, %v477
    %v479 = vlaneseq
    %v480 = vshrl.u32 %v479, 7
    %v481 = vsub.s32 2, %v480
    %v482 = vrot.slane %v469, %v481
    %v483 = vlaneseq
    %v484 = vshrl.u32 %v483, 7
    %v485 = vsub.s32 3, %v484
    %v486 = vrot.slane %v469, %v485
    %v493 = vunpack.c.l.b16 %v339
    %v494 = vunpack.c.h.b16 %v339
    %v495 = vunpack.c.l.b16 %v340
    %v496 = vunpack.c.h.b16 %v340
    %v497 = vpack.c.b16 %v493, %v493
    %v498 = vpack.c.b16 %v494, %v494
    %v499 = vpack.c.b16 %v495, %v495
    %v500 = vpack.c.b16 %v496, %v496
    %v633 = vunpack.c.l.b16 %v341
    %v634 = vunpack.c.h.b16 %v341
    %v635 = vunpack.c.l.b16 %v342
    %v636 = vunpack.c.h.b16 %v342
    %v637 = vunpack.c.l.b16 %v343
    %v638 = vunpack.c.h.b16 %v343
    %v639 = vunpack.c.l.b16 %v344
    %v640 = vunpack.c.h.b16 %v344
    %v641 = vunpack.c.l.b16 %v345
    %v642 = vunpack.c.h.b16 %v345
    %v643 = vunpack.c.l.b16 %v346
    %v644 = vunpack.c.h.b16 %v346
    %v645 = vunpack.c.l.b16 %v347
    %v646 = vunpack.c.h.b16 %v347
    %v647 = vunpack.c.l.b16 %v348
    %v648 = vunpack.c.h.b16 %v348
    %v649 = vunpack.c.l.b16 %v349
    %v650 = vunpack.c.h.b16 %v349
    %v651 = vunpack.c.l.b16 %v350
    %v652 = vunpack.c.h.b16 %v350
    %v653 = vunpack.c.l.b16 %v351
    %v654 = vunpack.c.h.b16 %v351
    %v655 = vunpack.c.l.b16 %v352
    %v656 = vunpack.c.h.b16 %v352
    %v657 = vunpack.c.l.b16 %v353
    %v658 = vunpack.c.h.b16 %v353
    %v659 = vunpack.c.l.b16 %v354
    %v660 = vunpack.c.h.b16 %v354
    %v661 = vunpack.c.l.b16 %v355
    %v662 = vunpack.c.h.b16 %v355
    %v663 = vunpack.c.l.b16 %v356
    %v664 = vunpack.c.h.b16 %v356
    %v665 = vunpack.c.l.b16 %v357
    %v666 = vunpack.c.h.b16 %v357
    %v667 = vunpack.c.l.b16 %v358
    %v668 = vunpack.c.h.b16 %v358
    %v669 = vunpack.c.l.b16 %v359
    %v670 = vunpack.c.h.b16 %v359
    %v671 = vunpack.c.l.b16 %v360
    %v672 = vunpack.c.h.b16 %v360
    %v673 = vunpack.c.l.b16 %v361
    %v674 = vunpack.c.h.b16 %v361
    %v675 = vunpack.c.l.b16 %v362
    %v676 = vunpack.c.h.b16 %v362
    %v677 = vunpack.c.l.b16 %v363
    %v678 = vunpack.c.h.b16 %v363
    %v679 = vunpack.c.l.b16 %v364
    %v680 = vunpack.c.h.b16 %v364
    %v681 = vunpack.c.l.b16 %v365
    %v682 = vunpack.c.h.b16 %v365
    %v683 = vunpack.c.l.b16 %v366
    %v684 = vunpack.c.h.b16 %v366
    %v685 = vunpack.c.l.b16 %v367
    %v686 = vunpack.c.h.b16 %v367
    %v687 = vunpack.c.l.b16 %v368
    %v688 = vunpack.c.h.b16 %v368
    %v689 = vunpack.c.l.b16 %v369
    %v690 = vunpack.c.h.b16 %v369
    %v691 = vunpack.c.l.b16 %v370
    %v692 = vunpack.c.h.b16 %v370
    %v693 = vunpack.c.l.b16 %v371
    %v694 = vunpack.c.h.b16 %v371
    %v695 = vunpack.c.l.b16 %v372
    %v696 = vunpack.c.h.b16 %v372
    %v697 = vunpack.c.l.b16 %v373
    %v698 = vunpack.c.h.b16 %v373
    %v699 = vunpack.c.l.b16 %v374
    %v700 = vunpack.c.h.b16 %v374
    %v701 = vunpack.c.l.b16 %v375
    %v702 = vunpack.c.h.b16 %v375
    %v703 = vunpack.c.l.b16 %v376
    %v704 = vunpack.c.h.b16 %v376
    %v705 = vunpack.c.l.b16 %v377
    %v706 = vunpack.c.h.b16 %v377
    %v707 = vunpack.c.l.b16 %v378
    %v708 = vunpack.c.h.b16 %v378
    %v709 = vunpack.c.l.b16 %v379
    %v710 = vunpack.c.h.b16 %v379
    %v711 = vunpack.c.l.b16 %v380
    %v712 = vunpack.c.h.b16 %v380
    %v713 = vunpack.c.l.b16 %v381
    %v714 = vunpack.c.h.b16 %v381
    %v715 = vunpack.c.l.b16 %v382
    %v716 = vunpack.c.h.b16 %v382
    %v717 = vunpack.c.l.b16 %v383
    %v718 = vunpack.c.h.b16 %v383
    %v719 = vunpack.c.l.b16 %v384
    %v720 = vunpack.c.h.b16 %v384
    %v721 = vunpack.c.l.b16 %v385
    %v722 = vunpack.c.h.b16 %v385
    %v723 = vunpack.c.l.b16 %v386
    %v724 = vunpack.c.h.b16 %v386
    %v725 = vunpack.c.l.b16 %v387
    %v726 = vunpack.c.h.b16 %v387
    %v727 = vunpack.c.l.b16 %v388
    %v728 = vunpack.c.h.b16 %v388
    %v729 = vunpack.c.l.b16 %v389
    %v730 = vunpack.c.h.b16 %v389
    %v731 = vunpack.c.l.b16 %v390
    %v732 = vunpack.c.h.b16 %v390
    %v733 = vunpack.c.l.b16 %v391
    %v734 = vunpack.c.h.b16 %v391
    %v735 = vunpack.c.l.b16 %v392
    %v736 = vunpack.c.h.b16 %v392
    %v737 = vunpack.c.l.b16 %v393
    %v738 = vunpack.c.h.b16 %v393
    %v739 = vunpack.c.l.b16 %v394
    %v740 = vunpack.c.h.b16 %v394
    %v741 = vunpack.c.l.b16 %v395
    %v742 = vunpack.c.h.b16 %v395
    %v743 = vunpack.c.l.b16 %v396
    %v744 = vunpack.c.h.b16 %v396
    %v745 = vunpack.c.l.b16 %v397
    %v746 = vunpack.c.h.b16 %v397
    %v747 = vunpack.c.l.b16 %v398
    %v748 = vunpack.c.h.b16 %v398
    %v749 = vunpack.c.l.b16 %v399
    %v750 = vunpack.c.h.b16 %v399
    %v751 = vunpack.c.l.b16 %v400
    %v752 = vunpack.c.h.b16 %v400
    %v753 = vunpack.c.l.b16 %v401
    %v754 = vunpack.c.h.b16 %v401
    %v755 = vunpack.c.l.b16 %v402
    %v756 = vunpack.c.h.b16 %v402
    %v757 = vunpack.c.l.b16 %v403
    %v758 = vunpack.c.h.b16 %v403
    %v759 = vunpack.c.l.b16 %v404
    %v760 = vunpack.c.h.b16 %v404
    %v761 = vunpack.c.l.b16 %v405
    %v762 = vunpack.c.h.b16 %v405
    %v763 = vunpack.c.l.b16 %v406
    %v764 = vunpack.c.h.b16 %v406
    %v765 = vunpack.c.l.b16 %v407
    %v766 = vunpack.c.h.b16 %v407
    %v767 = vunpack.c.l.b16 %v408
    %v768 = vunpack.c.h.b16 %v408
    %v769 = vunpack.c.l.b16 %v409
    %v770 = vunpack.c.h.b16 %v409
    %v771 = vunpack.c.l.b16 %v410
    %v772 = vunpack.c.h.b16 %v410
    %v773 = vunpack.c.l.b16 %v411
    %v774 = vunpack.c.h.b16 %v411
    %v775 = vunpack.c.l.b16 %v412
    %v776 = vunpack.c.h.b16 %v412
    %v777 = vunpack.c.l.b16 %v413
    %v778 = vunpack.c.h.b16 %v413
    %v779 = vunpack.c.l.b16 %v414
    %v780 = vunpack.c.h.b16 %v414
    %v781 = vunpack.c.l.b16 %v415
    %v782 = vunpack.c.h.b16 %v415
    %v783 = vunpack.c.l.b16 %v416
    %v784 = vunpack.c.h.b16 %v416
    %v785 = vunpack.c.l.b16 %v417
    %v786 = vunpack.c.h.b16 %v417
    %v787 = vunpack.c.l.b16 %v418
    %v788 = vunpack.c.h.b16 %v418
    %v789 = vunpack.c.l.b16 %v419
    %v790 = vunpack.c.h.b16 %v419
    %v791 = vunpack.c.l.b16 %v420
    %v792 = vunpack.c.h.b16 %v420
    %v793 = vunpack.c.l.b16 %v421
    %v794 = vunpack.c.h.b16 %v421
    %v795 = vunpack.c.l.b16 %v422
    %v796 = vunpack.c.h.b16 %v422
    %v797 = vunpack.c.l.b16 %v423
    %v798 = vunpack.c.h.b16 %v423
    %v799 = vunpack.c.l.b16 %v424
    %v800 = vunpack.c.h.b16 %v424
    %v801 = vunpack.c.l.b16 %v425
    %v802 = vunpack.c.h.b16 %v425
    %v803 = vunpack.c.l.b16 %v426
    %v804 = vunpack.c.h.b16 %v426
    %v805 = vunpack.c.l.b16 %v427
    %v806 = vunpack.c.h.b16 %v427
    %v807 = vunpack.c.l.b16 %v428
    %v808 = vunpack.c.h.b16 %v428
    %v809 = vunpack.c.l.b16 %v429
    %v810 = vunpack.c.h.b16 %v429
    %v811 = vunpack.c.l.b16 %v430
    %v812 = vunpack.c.h.b16 %v430
    %v813 = vunpack.c.l.b16 %v431
    %v814 = vunpack.c.h.b16 %v431
    %v815 = vunpack.c.l.b16 %v432
    %v816 = vunpack.c.h.b16 %v432
    %v817 = vunpack.c.l.b16 %v433
    %v818 = vunpack.c.h.b16 %v433
    %v819 = vunpack.c.l.b16 %v434
    %v820 = vunpack.c.h.b16 %v434
    %v821 = vunpack.c.l.b16 %v435
    %v822 = vunpack.c.h.b16 %v435
    %v823 = vunpack.c.l.b16 %v436
    %v824 = vunpack.c.h.b16 %v436
    %v825 = vunpack.c.l.b16 %v437
    %v826 = vunpack.c.h.b16 %v437
    %v827 = vunpack.c.l.b16 %v438
    %v828 = vunpack.c.h.b16 %v438
    %v829 = vunpack.c.l.b16 %v439
    %v830 = vunpack.c.h.b16 %v439
    %v831 = vunpack.c.l.b16 %v440
    %v832 = vunpack.c.h.b16 %v440
    %v833 = vunpack.c.l.b16 %v441
    %v834 = vunpack.c.h.b16 %v441
    %v835 = vunpack.c.l.b16 %v442
    %v836 = vunpack.c.h.b16 %v442
    %v837 = vunpack.c.l.b16 %v443
    %v838 = vunpack.c.h.b16 %v443
    %v839 = vunpack.c.l.b16 %v444
    %v840 = vunpack.c.h.b16 %v444
    %v841 = vunpack.c.l.b16 %v445
    %v842 = vunpack.c.h.b16 %v445
    %v843 = vunpack.c.l.b16 %v446
    %v844 = vunpack.c.h.b16 %v446
    %v845 = vunpack.c.l.b16 %v447
    %v846 = vunpack.c.h.b16 %v447
    %v847 = vunpack.c.l.b16 %v448
    %v848 = vunpack.c.h.b16 %v448
    %v849 = vunpack.c.l.b16 %v449
    %v850 = vunpack.c.h.b16 %v449
    %v851 = vunpack.c.l.b16 %v450
    %v852 = vunpack.c.h.b16 %v450
    %v853 = vunpack.c.l.b16 %v451
    %v854 = vunpack.c.h.b16 %v451
    %v855 = vunpack.c.l.b16 %v452
    %v856 = vunpack.c.h.b16 %v452
    %v857 = vunpack.c.l.b16 %v453
    %v858 = vunpack.c.h.b16 %v453
    %v859 = vunpack.c.l.b16 %v454
    %v860 = vunpack.c.h.b16 %v454
    %v861 = vunpack.c.l.b16 %v455
    %v862 = vunpack.c.h.b16 %v455
    %v863 = vunpack.c.l.b16 %v456
    %v864 = vunpack.c.h.b16 %v456
    %v865 = vunpack.c.l.b16 %v457
    %v866 = vunpack.c.h.b16 %v457
    %v867 = vunpack.c.l.b16 %v458
    %v868 = vunpack.c.h.b16 %v458
    %v869 = vunpack.c.l.b16 %v459
    %v870 = vunpack.c.h.b16 %v459
    %v871 = vunpack.c.l.b16 %v460
    %v872 = vunpack.c.h.b16 %v460
    %v873 = vunpack.c.l.b16 %v461
    %v874 = vunpack.c.h.b16 %v461
    %v875 = vunpack.c.l.b16 %v462
    %v876 = vunpack.c.h.b16 %v462
    %v877 = vunpack.c.l.b16 %v463
    %v878 = vunpack.c.h.b16 %v463
    %v879 = vunpack.c.l.b16 %v464
    %v880 = vunpack.c.h.b16 %v464
    %v881 = vunpack.c.l.b16 %v465
    %v882 = vunpack.c.h.b16 %v465
    %v883 = vunpack.c.l.b16 %v466
    %v884 = vunpack.c.h.b16 %v466
    %v885 = vunpack.c.l.b16 %v467
    %v886 = vunpack.c.h.b16 %v467
    %v887 = vunpack.c.l.b16 %v468
    %v888 = vunpack.c.h.b16 %v468
    %v889 = vpack.c.b16 %v637, %v633
    %v890 = vpack.c.b16 %v638, %v634
    %v891 = vpack.c.b16 %v639, %v635
    %v892 = vpack.c.b16 %v640, %v636
    %v893 = vpack.c.b16 %v645, %v641
    %v894 = vpack.c.b16 %v646, %v642
    %v895 = vpack.c.b16 %v647, %v643
    %v896 = vpack.c.b16 %v648, %v644
    %v897 = vpack.c.b16 %v653, %v649
    %v898 = vpack.c.b16 %v654, %v650
    %v899 = vpack.c.b16 %v655, %v651
    %v900 = vpack.c.b16 %v656, %v652
    %v901 = vpack.c.b16 %v661, %v657
    %v902 = vpack.c.b16 %v662, %v658
    %v903 = vpack.c.b16 %v663, %v659
    %v904 = vpack.c.b16 %v664, %v660
    %v905 = vpack.c.b16 %v669, %v665
    %v906 = vpack.c.b16 %v670, %v666
    %v907 = vpack.c.b16 %v671, %v667
    %v908 = vpack.c.b16 %v672, %v668
    %v909 = vpack.c.b16 %v677, %v673
    %v910 = vpack.c.b16 %v678, %v674
    %v911 = vpack.c.b16 %v679, %v675
    %v912 = vpack.c.b16 %v680, %v676
    %v913 = vpack.c.b16 %v685, %v681
    %v914 = vpack.c.b16 %v686, %v682
    %v915 = vpack.c.b16 %v687, %v683
    %v916 = vpack.c.b16 %v688, %v684
    %v917 = vpack.c.b16 %v693, %v689
    %v918 = vpack.c.b16 %v694, %v690
    %v919 = vpack.c.b16 %v695, %v691
    %v920 = vpack.c.b16 %v696, %v692
    %v921 = vpack.c.b16 %v701, %v697
    %v922 = vpack.c.b16 %v702, %v698
    %v923 = vpack.c.b16 %v703, %v699
    %v924 = vpack.c.b16 %v704, %v700
    %v925 = vpack.c.b16 %v709, %v705
    %v926 = vpack.c.b16 %v710, %v706
    %v927 = vpack.c.b16 %v711, %v707
    %v928 = vpack.c.b16 %v712, %v708
    %v929 = vpack.c.b16 %v717, %v713
    %v930 = vpack.c.b16 %v718, %v714
    %v931 = vpack.c.b16 %v719, %v715
    %v932 = vpack.c.b16 %v720, %v716
    %v933 = vpack.c.b16 %v725, %v721
    %v934 = vpack.c.b16 %v726, %v722
    %v935 = vpack.c.b16 %v727, %v723
    %v936 = vpack.c.b16 %v728, %v724
    %v937 = vpack.c.b16 %v733, %v729
    %v938 = vpack.c.b16 %v734, %v730
    %v939 = vpack.c.b16 %v735, %v731
    %v940 = vpack.c.b16 %v736, %v732
    %v941 = vpack.c.b16 %v741, %v737
    %v942 = vpack.c.b16 %v742, %v738
    %v943 = vpack.c.b16 %v743, %v739
    %v944 = vpack.c.b16 %v744, %v740
    %v945 = vpack.c.b16 %v749, %v745
    %v946 = vpack.c.b16 %v750, %v746
    %v947 = vpack.c.b16 %v751, %v747
    %v948 = vpack.c.b16 %v752, %v748
    %v949 = vpack.c.b16 %v757, %v753
    %v950 = vpack.c.b16 %v758, %v754
    %v951 = vpack.c.b16 %v759, %v755
    %v952 = vpack.c.b16 %v760, %v756
    %v953 = vpack.c.b16 %v765, %v761
    %v954 = vpack.c.b16 %v766, %v762
    %v955 = vpack.c.b16 %v767, %v763
    %v956 = vpack.c.b16 %v768, %v764
    %v957 = vpack.c.b16 %v773, %v769
    %v958 = vpack.c.b16 %v774, %v770
    %v959 = vpack.c.b16 %v775, %v771
    %v960 = vpack.c.b16 %v776, %v772
    %v961 = vpack.c.b16 %v781, %v777
    %v962 = vpack.c.b16 %v782, %v778
    %v963 = vpack.c.b16 %v783, %v779
    %v964 = vpack.c.b16 %v784, %v780
    %v965 = vpack.c.b16 %v789, %v785
    %v966 = vpack.c.b16 %v790, %v786
    %v967 = vpack.c.b16 %v791, %v787
    %v968 = vpack.c.b16 %v792, %v788
    %v969 = vpack.c.b16 %v797, %v793
    %v970 = vpack.c.b16 %v798, %v794
    %v971 = vpack.c.b16 %v799, %v795
    %v972 = vpack.c.b16 %v800, %v796
    %v973 = vpack.c.b16 %v805, %v801
    %v974 = vpack.c.b16 %v806, %v802
    %v975 = vpack.c.b16 %v807, %v803
    %v976 = vpack.c.b16 %v808, %v804
    %v977 = vpack.c.b16 %v813, %v809
    %v978 = vpack.c.b16 %v814, %v810
    %v979 = vpack.c.b16 %v815, %v811
    %v980 = vpack.c.b16 %v816, %v812
    %v981 = vpack.c.b16 %v821, %v817
    %v982 = vpack.c.b16 %v822, %v818
    %v983 = vpack.c.b16 %v823, %v819
    %v984 = vpack.c.b16 %v824, %v820
    %v985 = vpack.c.b16 %v829, %v825
    %v986 = vpack.c.b16 %v830, %v826
    %v987 = vpack.c.b16 %v831, %v827
    %v988 = vpack.c.b16 %v832, %v828
    %v989 = vpack.c.b16 %v837, %v833
    %v990 = vpack.c.b16 %v838, %v834
    %v991 = vpack.c.b16 %v839, %v835
    %v992 = vpack.c.b16 %v840, %v836
    %v993 = vpack.c.b16 %v845, %v841
    %v994 = vpack.c.b16 %v846, %v842
    %v995 = vpack.c.b16 %v847, %v843
    %v996 = vpack.c.b16 %v848, %v844
    %v997 = vpack.c.b16 %v853, %v849
    %v998 = vpack.c.b16 %v854, %v850
    %v999 = vpack.c.b16 %v855, %v851
    %v1000 = vpack.c.b16 %v856, %v852
    %v1001 = vpack.c.b16 %v861, %v857
    %v1002 = vpack.c.b16 %v862, %v858
    %v1003 = vpack.c.b16 %v863, %v859
    %v1004 = vpack.c.b16 %v864, %v860
    %v1005 = vpack.c.b16 %v869, %v865
    %v1006 = vpack.c.b16 %v870, %v866
    %v1007 = vpack.c.b16 %v871, %v867
    %v1008 = vpack.c.b16 %v872, %v868
    %v1009 = vpack.c.b16 %v877, %v873
    %v1010 = vpack.c.b16 %v878, %v874
    %v1011 = vpack.c.b16 %v879, %v875
    %v1012 = vpack.c.b16 %v880, %v876
    %v1013 = vpack.c.b16 %v885, %v881
    %v1014 = vpack.c.b16 %v886, %v882
    %v1015 = vpack.c.b16 %v887, %v883
    %v1016 = vpack.c.b16 %v888, %v884
    %1145 = vmatprep.subr.bf16.mxu0 %v890
    %1146 = vmatpush1.bf16.msra.mxu0 %v889
    %1147 = vmatprep.subr.bf16.mxu0 %v894
    %1148 = vmatpush1.bf16.msra.mxu0 %v893
    %1149 = vmatprep.subr.bf16.mxu0 %v898
    %1150 = vmatpush1.bf16.msra.mxu0 %v897
    %1151 = vmatprep.subr.bf16.mxu0 %v902
    %1152 = vmatpush1.bf16.msra.mxu0 %v901
    %1153 = vmatprep.subr.bf16.mxu0 %v906
    %1154 = vmatpush1.bf16.msra.mxu0 %v905
    %1155 = vmatprep.subr.bf16.mxu0 %v910
    %1156 = vmatpush1.bf16.msra.mxu0 %v909
    %1157 = vmatprep.subr.bf16.mxu0 %v914
    %1158 = vmatpush1.bf16.msra.mxu0 %v913
    %1159 = vmatprep.subr.bf16.mxu0 %v918
    %1160 = vmatpush1.bf16.msra.mxu0 %v917
    %1161 = vmatprep.subr.bf16.mxu0 %v922
    %1162 = vmatpush1.bf16.msra.mxu0 %v921
    %1163 = vmatprep.subr.bf16.mxu0 %v926
    %1164 = vmatpush1.bf16.msra.mxu0 %v925
    %1165 = vmatprep.subr.bf16.mxu0 %v930
    %1166 = vmatpush1.bf16.msra.mxu0 %v929
    %1167 = vmatprep.subr.bf16.mxu0 %v934
    %1168 = vmatpush1.bf16.msra.mxu0 %v933
    %1169 = vmatprep.subr.bf16.mxu0 %v938
    %1170 = vmatpush1.bf16.msra.mxu0 %v937
    %1171 = vmatprep.subr.bf16.mxu0 %v942
    %1172 = vmatpush1.bf16.msra.mxu0 %v941
    %1173 = vmatprep.subr.bf16.mxu0 %v946
    %1174 = vmatpush1.bf16.msra.mxu0 %v945
    %1175 = vmatprep.subr.bf16.mxu0 %v950
    %1176 = vmatpush1.bf16.msra.mxu0 %v949
    %1177 = vmatprep.mubr.bf16.mxu0 %v498
    %1178 = vmatmul.mubr.bf16.gmra.mrb[0].mxu0 %v497
    %v1179 = vpop.f32.mrb[0].mxu0
    %v1180 = vadd.f32 %v474, %v1179
    %v1181 = vpop.f32.mrb[0].mxu0
    %v1182 = vadd.f32 %v478, %v1181
    %v1183 = vpop.f32.mrb[0].mxu0
    %v1184 = vpop.f32.mrb[0].mxu0
    %1185 = vdwg.mxu0
    %1186 = vmatprep.subr.bf16.mxu0 %v954
    %1187 = vmatpush1.bf16.msra.mxu0 %v953
    %1188 = vmatprep.subr.bf16.mxu0 %v958
    %1189 = vmatpush1.bf16.msra.mxu0 %v957
    %1190 = vmatprep.subr.bf16.mxu0 %v962
    %1191 = vmatpush1.bf16.msra.mxu0 %v961
    %1192 = vmatprep.subr.bf16.mxu0 %v966
    %1193 = vmatpush1.bf16.msra.mxu0 %v965
    %1194 = vmatprep.subr.bf16.mxu0 %v970
    %1195 = vmatpush1.bf16.msra.mxu0 %v969
    %1196 = vmatprep.subr.bf16.mxu0 %v974
    %1197 = vmatpush1.bf16.msra.mxu0 %v973
    %1198 = vmatprep.subr.bf16.mxu0 %v978
    %1199 = vmatpush1.bf16.msra.mxu0 %v977
    %1200 = vmatprep.subr.bf16.mxu0 %v982
    %1201 = vmatpush1.bf16.msra.mxu0 %v981
    %1202 = vmatprep.subr.bf16.mxu0 %v986
    %1203 = vmatpush1.bf16.msra.mxu0 %v985
    %1204 = vmatprep.subr.bf16.mxu0 %v990
    %1205 = vmatpush1.bf16.msra.mxu0 %v989
    %1206 = vmatprep.subr.bf16.mxu0 %v994
    %1207 = vmatpush1.bf16.msra.mxu0 %v993
    %1208 = vmatprep.subr.bf16.mxu0 %v998
    %1209 = vmatpush1.bf16.msra.mxu0 %v997
    %1210 = vmatprep.subr.bf16.mxu0 %v1002
    %1211 = vmatpush1.bf16.msra.mxu0 %v1001
    %1212 = vmatprep.subr.bf16.mxu0 %v1006
    %1213 = vmatpush1.bf16.msra.mxu0 %v1005
    %1214 = vmatprep.subr.bf16.mxu0 %v1010
    %1215 = vmatpush1.bf16.msra.mxu0 %v1009
    %1216 = vmatprep.subr.bf16.mxu0 %v1014
    %1217 = vmatpush1.bf16.msra.mxu0 %v1013
    %1218 = vmatprep.mubr.bf16.mxu0 %v500
    %1219 = vmatmul.mubr.bf16.gmra.mrb[0].mxu0 %v499
    %v1220 = vpop.f32.mrb[0].mxu0
    %v1221 = vadd.f32 %v1180, %v1220
    %v1222 = vpop.f32.mrb[0].mxu0
    %v1223 = vadd.f32 %v1182, %v1222
    %v1224 = vpop.f32.mrb[0].mxu0
    %v1225 = vpop.f32.mrb[0].mxu0
    %1226 = vdwg.mxu0
    %1227 = vmatprep.subr.bf16.mxu0 %v892
    %1228 = vmatpush1.bf16.msra.mxu0 %v891
    %1229 = vmatprep.subr.bf16.mxu0 %v896
    %1230 = vmatpush1.bf16.msra.mxu0 %v895
    %1231 = vmatprep.subr.bf16.mxu0 %v900
    %1232 = vmatpush1.bf16.msra.mxu0 %v899
    %1233 = vmatprep.subr.bf16.mxu0 %v904
    %1234 = vmatpush1.bf16.msra.mxu0 %v903
    %1235 = vmatprep.subr.bf16.mxu0 %v908
    %1236 = vmatpush1.bf16.msra.mxu0 %v907
    %1237 = vmatprep.subr.bf16.mxu0 %v912
    %1238 = vmatpush1.bf16.msra.mxu0 %v911
    %1239 = vmatprep.subr.bf16.mxu0 %v916
    %1240 = vmatpush1.bf16.msra.mxu0 %v915
    %1241 = vmatprep.subr.bf16.mxu0 %v920
    %1242 = vmatpush1.bf16.msra.mxu0 %v919
    %1243 = vmatprep.subr.bf16.mxu0 %v924
    %1244 = vmatpush1.bf16.msra.mxu0 %v923
    %1245 = vmatprep.subr.bf16.mxu0 %v928
    %1246 = vmatpush1.bf16.msra.mxu0 %v927
    %1247 = vmatprep.subr.bf16.mxu0 %v932
    %1248 = vmatpush1.bf16.msra.mxu0 %v931
    %1249 = vmatprep.subr.bf16.mxu0 %v936
    %1250 = vmatpush1.bf16.msra.mxu0 %v935
    %1251 = vmatprep.subr.bf16.mxu0 %v940
    %1252 = vmatpush1.bf16.msra.mxu0 %v939
    %1253 = vmatprep.subr.bf16.mxu0 %v944
    %1254 = vmatpush1.bf16.msra.mxu0 %v943
    %1255 = vmatprep.subr.bf16.mxu0 %v948
    %1256 = vmatpush1.bf16.msra.mxu0 %v947
    %1257 = vmatprep.subr.bf16.mxu0 %v952
    %1258 = vmatpush1.bf16.msra.mxu0 %v951
    %1259 = vmatprep.mubr.bf16.mxu0 %v498
    %1260 = vmatmul.mubr.bf16.gmra.mrb[0].mxu0 %v497
    %v1261 = vpop.f32.mrb[0].mxu0
    %v1262 = vadd.f32 %v482, %v1261
    %v1263 = vpop.f32.mrb[0].mxu0
    %v1264 = vadd.f32 %v486, %v1263
    %v1265 = vpop.f32.mrb[0].mxu0
    %v1266 = vpop.f32.mrb[0].mxu0
    %1267 = vdwg.mxu0
    %1268 = vmatprep.subr.bf16.mxu0 %v956
    %1269 = vmatpush1.bf16.msra.mxu0 %v955
    %1270 = vmatprep.subr.bf16.mxu0 %v960
    %1271 = vmatpush1.bf16.msra.mxu0 %v959
    %1272 = vmatprep.subr.bf16.mxu0 %v964
    %1273 = vmatpush1.bf16.msra.mxu0 %v963
    %1274 = vmatprep.subr.bf16.mxu0 %v968
    %1275 = vmatpush1.bf16.msra.mxu0 %v967
    %1276 = vmatprep.subr.bf16.mxu0 %v972
    %1277 = vmatpush1.bf16.msra.mxu0 %v971
    %1278 = vmatprep.subr.bf16.mxu0 %v976
    %1279 = vmatpush1.bf16.msra.mxu0 %v975
    %1280 = vmatprep.subr.bf16.mxu0 %v980
    %1281 = vmatpush1.bf16.msra.mxu0 %v979
    %1282 = vmatprep.subr.bf16.mxu0 %v984
    %1283 = vmatpush1.bf16.msra.mxu0 %v983
    %1284 = vmatprep.subr.bf16.mxu0 %v988
    %1285 = vmatpush1.bf16.msra.mxu0 %v987
    %1286 = vmatprep.subr.bf16.mxu0 %v992
    %1287 = vmatpush1.bf16.msra.mxu0 %v991
    %1288 = vmatprep.subr.bf16.mxu0 %v996
    %1289 = vmatpush1.bf16.msra.mxu0 %v995
    %1290 = vmatprep.subr.bf16.mxu0 %v1000
    %1291 = vmatpush1.bf16.msra.mxu0 %v999
    %1292 = vmatprep.subr.bf16.mxu0 %v1004
    %1293 = vmatpush1.bf16.msra.mxu0 %v1003
    %1294 = vmatprep.subr.bf16.mxu0 %v1008
    %1295 = vmatpush1.bf16.msra.mxu0 %v1007
    %1296 = vmatprep.subr.bf16.mxu0 %v1012
    %1297 = vmatpush1.bf16.msra.mxu0 %v1011
    %1298 = vmatprep.subr.bf16.mxu0 %v1016
    %1299 = vmatpush1.bf16.msra.mxu0 %v1015
    %1300 = vmatprep.mubr.bf16.mxu0 %v500
    %1301 = vmatmul.mubr.bf16.gmra.mrb[0].mxu0 %v499
    %v1302 = vpop.f32.mrb[0].mxu0
    %v1303 = vadd.f32 %v1262, %v1302
    %v1304 = vpop.f32.mrb[0].mxu0
    %v1305 = vadd.f32 %v1264, %v1304
    %v1306 = vpop.f32.mrb[0].mxu0
    %v1307 = vpop.f32.mrb[0].mxu0
    %1308 = vdwg.mxu0
    %v1309 = vmax.f32 %v1221, 0.0
    %v1310 = vmax.f32 %v1223, 0.0
    %v1311 = vmax.f32 %v1303, 0.0
    %v1312 = vmax.f32 %v1305, 0.0
    %v1313 = vpack.c.bf16 %v1309, %v1309
    %v1314 = vpack.c.bf16 %v1310, %v1310
    %v1315 = vpack.c.bf16 %v1311, %v1311
    %v1316 = vpack.c.bf16 %v1312, %v1312
    %v1321 = vunpack.c.l.b16 %v1313
    %v1322 = vunpack.c.l.b16 %v1314
    %v1323 = vunpack.c.l.b16 %v1315
    %v1324 = vunpack.c.l.b16 %v1316
    %v1325 = vpack.c.b16 %v1322, %v1321
    %v1326 = vpack.c.b16 %v1324, %v1323
    %1329 = vst [vmem:[#allocation3] sm:$0xff] %v1325
    %1330 = vst [vmem:[#allocation3 + $0x8] sm:$0xff] %v1326
    %v1331 = vld [vmem:[#allocation3] sm:$0xff]
    %v1332 = vld [vmem:[#allocation3 + $0x8] sm:$0xff]
    %v1333 = vld [vmem:[%s7] sm:$0xff]
    %v1334 = vld [vmem:[%s7 + $0x8] sm:$0xff]
    %v1335 = vld [vmem:[%s7 + $0x10] sm:$0xff]
    %v1336 = vld [vmem:[%s7 + $0x18] sm:$0xff]
    %v1337 = vld [vmem:[%s7 + $0x20] sm:$0xff]
    %v1338 = vld [vmem:[%s7 + $0x28] sm:$0xff]
    %v1339 = vld [vmem:[%s7 + $0x30] sm:$0xff]
    %v1340 = vld [vmem:[%s7 + $0x38] sm:$0xff]
    %v1341 = vld [vmem:[%s7 + $0x40] sm:$0xff]
    %v1342 = vld [vmem:[%s7 + $0x48] sm:$0xff]
    %v1343 = vld [vmem:[%s7 + $0x50] sm:$0xff]
    %v1344 = vld [vmem:[%s7 + $0x58] sm:$0xff]
    %v1345 = vld [vmem:[%s7 + $0x60] sm:$0xff]
    %v1346 = vld [vmem:[%s7 + $0x68] sm:$0xff]
    %v1347 = vld [vmem:[%s7 + $0x70] sm:$0xff]
    %v1348 = vld [vmem:[%s7 + $0x78] sm:$0xff]
    %v1349 = vld [vmem:[%s7 + $0x80] sm:$0xff]
    %v1350 = vld [vmem:[%s7 + $0x88] sm:$0xff]
    %v1351 = vld [vmem:[%s7 + $0x90] sm:$0xff]
    %v1352 = vld [vmem:[%s7 + $0x98] sm:$0xff]
    %v1353 = vld [vmem:[%s7 + $0xa0] sm:$0xff]
    %v1354 = vld [vmem:[%s7 + $0xa8] sm:$0xff]
    %v1355 = vld [vmem:[%s7 + $0xb0] sm:$0xff]
    %v1356 = vld [vmem:[%s7 + $0xb8] sm:$0xff]
    %v1357 = vld [vmem:[%s7 + $0xc0] sm:$0xff]
    %v1358 = vld [vmem:[%s7 + $0xc8] sm:$0xff]
    %v1359 = vld [vmem:[%s7 + $0xd0] sm:$0xff]
    %v1360 = vld [vmem:[%s7 + $0xd8] sm:$0xff]
    %v1361 = vld [vmem:[%s7 + $0xe0] sm:$0xff]
    %v1362 = vld [vmem:[%s7 + $0xe8] sm:$0xff]
    %v1363 = vld [vmem:[%s7 + $0xf0] sm:$0xff]
    %v1364 = vld [vmem:[%s7 + $0xf8] sm:$0xff]
    %v1365 = vld [vmem:[%s7 + $0x100] sm:$0xff]
    %v1366 = vld [vmem:[%s7 + $0x108] sm:$0xff]
    %v1367 = vld [vmem:[%s7 + $0x110] sm:$0xff]
    %v1368 = vld [vmem:[%s7 + $0x118] sm:$0xff]
    %v1369 = vld [vmem:[%s7 + $0x120] sm:$0xff]
    %v1370 = vld [vmem:[%s7 + $0x128] sm:$0xff]
    %v1371 = vld [vmem:[%s7 + $0x130] sm:$0xff]
    %v1372 = vld [vmem:[%s7 + $0x138] sm:$0xff]
    %v1373 = vld [vmem:[%s7 + $0x140] sm:$0xff]
    %v1374 = vld [vmem:[%s7 + $0x148] sm:$0xff]
    %v1375 = vld [vmem:[%s7 + $0x150] sm:$0xff]
    %v1376 = vld [vmem:[%s7 + $0x158] sm:$0xff]
    %v1377 = vld [vmem:[%s7 + $0x160] sm:$0xff]
    %v1378 = vld [vmem:[%s7 + $0x168] sm:$0xff]
    %v1379 = vld [vmem:[%s7 + $0x170] sm:$0xff]
    %v1380 = vld [vmem:[%s7 + $0x178] sm:$0xff]
    %v1381 = vld [vmem:[%s7 + $0x180] sm:$0xff]
    %v1382 = vld [vmem:[%s7 + $0x188] sm:$0xff]
    %v1383 = vld [vmem:[%s7 + $0x190] sm:$0xff]
    %v1384 = vld [vmem:[%s7 + $0x198] sm:$0xff]
    %v1385 = vld [vmem:[%s7 + $0x1a0] sm:$0xff]
    %v1386 = vld [vmem:[%s7 + $0x1a8] sm:$0xff]
    %v1387 = vld [vmem:[%s7 + $0x1b0] sm:$0xff]
    %v1388 = vld [vmem:[%s7 + $0x1b8] sm:$0xff]
    %v1389 = vld [vmem:[%s7 + $0x1c0] sm:$0xff]
    %v1390 = vld [vmem:[%s7 + $0x1c8] sm:$0xff]
    %v1391 = vld [vmem:[%s7 + $0x1d0] sm:$0xff]
    %v1392 = vld [vmem:[%s7 + $0x1d8] sm:$0xff]
    %v1393 = vld [vmem:[%s7 + $0x1e0] sm:$0xff]
    %v1394 = vld [vmem:[%s7 + $0x1e8] sm:$0xff]
    %v1395 = vld [vmem:[%s7 + $0x1f0] sm:$0xff]
    %v1396 = vld [vmem:[%s7 + $0x1f8] sm:$0xff]
    %v1397 = vld [vmem:[%s7 + $0x200] sm:$0xff]
    %v1398 = vld [vmem:[%s7 + $0x208] sm:$0xff]
    %v1399 = vld [vmem:[%s7 + $0x210] sm:$0xff]
    %v1400 = vld [vmem:[%s7 + $0x218] sm:$0xff]
    %v1401 = vld [vmem:[%s7 + $0x220] sm:$0xff]
    %v1402 = vld [vmem:[%s7 + $0x228] sm:$0xff]
    %v1403 = vld [vmem:[%s7 + $0x230] sm:$0xff]
    %v1404 = vld [vmem:[%s7 + $0x238] sm:$0xff]
    %v1405 = vld [vmem:[%s7 + $0x240] sm:$0xff]
    %v1406 = vld [vmem:[%s7 + $0x248] sm:$0xff]
    %v1407 = vld [vmem:[%s7 + $0x250] sm:$0xff]
    %v1408 = vld [vmem:[%s7 + $0x258] sm:$0xff]
    %v1409 = vld [vmem:[%s7 + $0x260] sm:$0xff]
    %v1410 = vld [vmem:[%s7 + $0x268] sm:$0xff]
    %v1411 = vld [vmem:[%s7 + $0x270] sm:$0xff]
    %v1412 = vld [vmem:[%s7 + $0x278] sm:$0xff]
    %v1413 = vld [vmem:[%s7 + $0x280] sm:$0xff]
    %v1414 = vld [vmem:[%s7 + $0x288] sm:$0xff]
    %v1415 = vld [vmem:[%s7 + $0x290] sm:$0xff]
    %v1416 = vld [vmem:[%s7 + $0x298] sm:$0xff]
    %v1417 = vld [vmem:[%s7 + $0x2a0] sm:$0xff]
    %v1418 = vld [vmem:[%s7 + $0x2a8] sm:$0xff]
    %v1419 = vld [vmem:[%s7 + $0x2b0] sm:$0xff]
    %v1420 = vld [vmem:[%s7 + $0x2b8] sm:$0xff]
    %v1421 = vld [vmem:[%s7 + $0x2c0] sm:$0xff]
    %v1422 = vld [vmem:[%s7 + $0x2c8] sm:$0xff]
    %v1423 = vld [vmem:[%s7 + $0x2d0] sm:$0xff]
    %v1424 = vld [vmem:[%s7 + $0x2d8] sm:$0xff]
    %v1425 = vld [vmem:[%s7 + $0x2e0] sm:$0xff]
    %v1426 = vld [vmem:[%s7 + $0x2e8] sm:$0xff]
    %v1427 = vld [vmem:[%s7 + $0x2f0] sm:$0xff]
    %v1428 = vld [vmem:[%s7 + $0x2f8] sm:$0xff]
    %v1429 = vld [vmem:[%s7 + $0x300] sm:$0xff]
    %v1430 = vld [vmem:[%s7 + $0x308] sm:$0xff]
    %v1431 = vld [vmem:[%s7 + $0x310] sm:$0xff]
    %v1432 = vld [vmem:[%s7 + $0x318] sm:$0xff]
    %v1433 = vld [vmem:[%s7 + $0x320] sm:$0xff]
    %v1434 = vld [vmem:[%s7 + $0x328] sm:$0xff]
    %v1435 = vld [vmem:[%s7 + $0x330] sm:$0xff]
    %v1436 = vld [vmem:[%s7 + $0x338] sm:$0xff]
    %v1437 = vld [vmem:[%s7 + $0x340] sm:$0xff]
    %v1438 = vld [vmem:[%s7 + $0x348] sm:$0xff]
    %v1439 = vld [vmem:[%s7 + $0x350] sm:$0xff]
    %v1440 = vld [vmem:[%s7 + $0x358] sm:$0xff]
    %v1441 = vld [vmem:[%s7 + $0x360] sm:$0xff]
    %v1442 = vld [vmem:[%s7 + $0x368] sm:$0xff]
    %v1443 = vld [vmem:[%s7 + $0x370] sm:$0xff]
    %v1444 = vld [vmem:[%s7 + $0x378] sm:$0xff]
    %v1445 = vld [vmem:[%s7 + $0x380] sm:$0xff]
    %v1446 = vld [vmem:[%s7 + $0x388] sm:$0xff]
    %v1447 = vld [vmem:[%s7 + $0x390] sm:$0xff]
    %v1448 = vld [vmem:[%s7 + $0x398] sm:$0xff]
    %v1449 = vld [vmem:[%s7 + $0x3a0] sm:$0xff]
    %v1450 = vld [vmem:[%s7 + $0x3a8] sm:$0xff]
    %v1451 = vld [vmem:[%s7 + $0x3b0] sm:$0xff]
    %v1452 = vld [vmem:[%s7 + $0x3b8] sm:$0xff]
    %v1453 = vld [vmem:[%s7 + $0x3c0] sm:$0xff]
    %v1454 = vld [vmem:[%s7 + $0x3c8] sm:$0xff]
    %v1455 = vld [vmem:[%s7 + $0x3d0] sm:$0xff]
    %v1456 = vld [vmem:[%s7 + $0x3d8] sm:$0xff]
    %v1457 = vld [vmem:[%s7 + $0x3e0] sm:$0xff]
    %v1458 = vld [vmem:[%s7 + $0x3e8] sm:$0xff]
    %v1459 = vld [vmem:[%s7 + $0x3f0] sm:$0xff]
    %v1460 = vld [vmem:[%s7 + $0x3f8] sm:$0xff]
    %v1461 = vld [vmem:[%s8] sm:$0xf]
    %v1463 = vlaneseq
    %v1464 = vshrl.u32 %v1463, 7
    %v1465 = vsub.s32 0, %v1464
    %v1466 = vrot.slane %v1461, %v1465
    %v1467 = vlaneseq
    %v1468 = vshrl.u32 %v1467, 7
    %v1469 = vsub.s32 1, %v1468
    %v1470 = vrot.slane %v1461, %v1469
    %v1471 = vlaneseq
    %v1472 = vshrl.u32 %v1471, 7
    %v1473 = vsub.s32 2, %v1472
    %v1474 = vrot.slane %v1461, %v1473
    %v1475 = vlaneseq
    %v1476 = vshrl.u32 %v1475, 7
    %v1477 = vsub.s32 3, %v1476
    %v1478 = vrot.slane %v1461, %v1477
    %v1485 = vunpack.c.l.b16 %v1331
    %v1486 = vunpack.c.h.b16 %v1331
    %v1487 = vunpack.c.l.b16 %v1332
    %v1488 = vunpack.c.h.b16 %v1332
    %v1489 = vpack.c.b16 %v1485, %v1485
    %v1490 = vpack.c.b16 %v1486, %v1486
    %v1491 = vpack.c.b16 %v1487, %v1487
    %v1492 = vpack.c.b16 %v1488, %v1488
    %v1625 = vunpack.c.l.b16 %v1333
    %v1626 = vunpack.c.h.b16 %v1333
    %v1627 = vunpack.c.l.b16 %v1334
    %v1628 = vunpack.c.h.b16 %v1334
    %v1629 = vunpack.c.l.b16 %v1335
    %v1630 = vunpack.c.h.b16 %v1335
    %v1631 = vunpack.c.l.b16 %v1336
    %v1632 = vunpack.c.h.b16 %v1336
    %v1633 = vunpack.c.l.b16 %v1337
    %v1634 = vunpack.c.h.b16 %v1337
    %v1635 = vunpack.c.l.b16 %v1338
    %v1636 = vunpack.c.h.b16 %v1338
    %v1637 = vunpack.c.l.b16 %v1339
    %v1638 = vunpack.c.h.b16 %v1339
    %v1639 = vunpack.c.l.b16 %v1340
    %v1640 = vunpack.c.h.b16 %v1340
    %v1641 = vunpack.c.l.b16 %v1341
    %v1642 = vunpack.c.h.b16 %v1341
    %v1643 = vunpack.c.l.b16 %v1342
    %v1644 = vunpack.c.h.b16 %v1342
    %v1645 = vunpack.c.l.b16 %v1343
    %v1646 = vunpack.c.h.b16 %v1343
    %v1647 = vunpack.c.l.b16 %v1344
    %v1648 = vunpack.c.h.b16 %v1344
    %v1649 = vunpack.c.l.b16 %v1345
    %v1650 = vunpack.c.h.b16 %v1345
    %v1651 = vunpack.c.l.b16 %v1346
    %v1652 = vunpack.c.h.b16 %v1346
    %v1653 = vunpack.c.l.b16 %v1347
    %v1654 = vunpack.c.h.b16 %v1347
    %v1655 = vunpack.c.l.b16 %v1348
    %v1656 = vunpack.c.h.b16 %v1348
    %v1657 = vunpack.c.l.b16 %v1349
    %v1658 = vunpack.c.h.b16 %v1349
    %v1659 = vunpack.c.l.b16 %v1350
    %v1660 = vunpack.c.h.b16 %v1350
    %v1661 = vunpack.c.l.b16 %v1351
    %v1662 = vunpack.c.h.b16 %v1351
    %v1663 = vunpack.c.l.b16 %v1352
    %v1664 = vunpack.c.h.b16 %v1352
    %v1665 = vunpack.c.l.b16 %v1353
    %v1666 = vunpack.c.h.b16 %v1353
    %v1667 = vunpack.c.l.b16 %v1354
    %v1668 = vunpack.c.h.b16 %v1354
    %v1669 = vunpack.c.l.b16 %v1355
    %v1670 = vunpack.c.h.b16 %v1355
    %v1671 = vunpack.c.l.b16 %v1356
    %v1672 = vunpack.c.h.b16 %v1356
    %v1673 = vunpack.c.l.b16 %v1357
    %v1674 = vunpack.c.h.b16 %v1357
    %v1675 = vunpack.c.l.b16 %v1358
    %v1676 = vunpack.c.h.b16 %v1358
    %v1677 = vunpack.c.l.b16 %v1359
    %v1678 = vunpack.c.h.b16 %v1359
    %v1679 = vunpack.c.l.b16 %v1360
    %v1680 = vunpack.c.h.b16 %v1360
    %v1681 = vunpack.c.l.b16 %v1361
    %v1682 = vunpack.c.h.b16 %v1361
    %v1683 = vunpack.c.l.b16 %v1362
    %v1684 = vunpack.c.h.b16 %v1362
    %v1685 = vunpack.c.l.b16 %v1363
    %v1686 = vunpack.c.h.b16 %v1363
    %v1687 = vunpack.c.l.b16 %v1364
    %v1688 = vunpack.c.h.b16 %v1364
    %v1689 = vunpack.c.l.b16 %v1365
    %v1690 = vunpack.c.h.b16 %v1365
    %v1691 = vunpack.c.l.b16 %v1366
    %v1692 = vunpack.c.h.b16 %v1366
    %v1693 = vunpack.c.l.b16 %v1367
    %v1694 = vunpack.c.h.b16 %v1367
    %v1695 = vunpack.c.l.b16 %v1368
    %v1696 = vunpack.c.h.b16 %v1368
    %v1697 = vunpack.c.l.b16 %v1369
    %v1698 = vunpack.c.h.b16 %v1369
    %v1699 = vunpack.c.l.b16 %v1370
    %v1700 = vunpack.c.h.b16 %v1370
    %v1701 = vunpack.c.l.b16 %v1371
    %v1702 = vunpack.c.h.b16 %v1371
    %v1703 = vunpack.c.l.b16 %v1372
    %v1704 = vunpack.c.h.b16 %v1372
    %v1705 = vunpack.c.l.b16 %v1373
    %v1706 = vunpack.c.h.b16 %v1373
    %v1707 = vunpack.c.l.b16 %v1374
    %v1708 = vunpack.c.h.b16 %v1374
    %v1709 = vunpack.c.l.b16 %v1375
    %v1710 = vunpack.c.h.b16 %v1375
    %v1711 = vunpack.c.l.b16 %v1376
    %v1712 = vunpack.c.h.b16 %v1376
    %v1713 = vunpack.c.l.b16 %v1377
    %v1714 = vunpack.c.h.b16 %v1377
    %v1715 = vunpack.c.l.b16 %v1378
    %v1716 = vunpack.c.h.b16 %v1378
    %v1717 = vunpack.c.l.b16 %v1379
    %v1718 = vunpack.c.h.b16 %v1379
    %v1719 = vunpack.c.l.b16 %v1380
    %v1720 = vunpack.c.h.b16 %v1380
    %v1721 = vunpack.c.l.b16 %v1381
    %v1722 = vunpack.c.h.b16 %v1381
    %v1723 = vunpack.c.l.b16 %v1382
    %v1724 = vunpack.c.h.b16 %v1382
    %v1725 = vunpack.c.l.b16 %v1383
    %v1726 = vunpack.c.h.b16 %v1383
    %v1727 = vunpack.c.l.b16 %v1384
    %v1728 = vunpack.c.h.b16 %v1384
    %v1729 = vunpack.c.l.b16 %v1385
    %v1730 = vunpack.c.h.b16 %v1385
    %v1731 = vunpack.c.l.b16 %v1386
    %v1732 = vunpack.c.h.b16 %v1386
    %v1733 = vunpack.c.l.b16 %v1387
    %v1734 = vunpack.c.h.b16 %v1387
    %v1735 = vunpack.c.l.b16 %v1388
    %v1736 = vunpack.c.h.b16 %v1388
    %v1737 = vunpack.c.l.b16 %v1389
    %v1738 = vunpack.c.h.b16 %v1389
    %v1739 = vunpack.c.l.b16 %v1390
    %v1740 = vunpack.c.h.b16 %v1390
    %v1741 = vunpack.c.l.b16 %v1391
    %v1742 = vunpack.c.h.b16 %v1391
    %v1743 = vunpack.c.l.b16 %v1392
    %v1744 = vunpack.c.h.b16 %v1392
    %v1745 = vunpack.c.l.b16 %v1393
    %v1746 = vunpack.c.h.b16 %v1393
    %v1747 = vunpack.c.l.b16 %v1394
    %v1748 = vunpack.c.h.b16 %v1394
    %v1749 = vunpack.c.l.b16 %v1395
    %v1750 = vunpack.c.h.b16 %v1395
    %v1751 = vunpack.c.l.b16 %v1396
    %v1752 = vunpack.c.h.b16 %v1396
    %v1753 = vunpack.c.l.b16 %v1397
    %v1754 = vunpack.c.h.b16 %v1397
    %v1755 = vunpack.c.l.b16 %v1398
    %v1756 = vunpack.c.h.b16 %v1398
    %v1757 = vunpack.c.l.b16 %v1399
    %v1758 = vunpack.c.h.b16 %v1399
    %v1759 = vunpack.c.l.b16 %v1400
    %v1760 = vunpack.c.h.b16 %v1400
    %v1761 = vunpack.c.l.b16 %v1401
    %v1762 = vunpack.c.h.b16 %v1401
    %v1763 = vunpack.c.l.b16 %v1402
    %v1764 = vunpack.c.h.b16 %v1402
    %v1765 = vunpack.c.l.b16 %v1403
    %v1766 = vunpack.c.h.b16 %v1403
    %v1767 = vunpack.c.l.b16 %v1404
    %v1768 = vunpack.c.h.b16 %v1404
    %v1769 = vunpack.c.l.b16 %v1405
    %v1770 = vunpack.c.h.b16 %v1405
    %v1771 = vunpack.c.l.b16 %v1406
    %v1772 = vunpack.c.h.b16 %v1406
    %v1773 = vunpack.c.l.b16 %v1407
    %v1774 = vunpack.c.h.b16 %v1407
    %v1775 = vunpack.c.l.b16 %v1408
    %v1776 = vunpack.c.h.b16 %v1408
    %v1777 = vunpack.c.l.b16 %v1409
    %v1778 = vunpack.c.h.b16 %v1409
    %v1779 = vunpack.c.l.b16 %v1410
    %v1780 = vunpack.c.h.b16 %v1410
    %v1781 = vunpack.c.l.b16 %v1411
    %v1782 = vunpack.c.h.b16 %v1411
    %v1783 = vunpack.c.l.b16 %v1412
    %v1784 = vunpack.c.h.b16 %v1412
    %v1785 = vunpack.c.l.b16 %v1413
    %v1786 = vunpack.c.h.b16 %v1413
    %v1787 = vunpack.c.l.b16 %v1414
    %v1788 = vunpack.c.h.b16 %v1414
    %v1789 = vunpack.c.l.b16 %v1415
    %v1790 = vunpack.c.h.b16 %v1415
    %v1791 = vunpack.c.l.b16 %v1416
    %v1792 = vunpack.c.h.b16 %v1416
    %v1793 = vunpack.c.l.b16 %v1417
    %v1794 = vunpack.c.h.b16 %v1417
    %v1795 = vunpack.c.l.b16 %v1418
    %v1796 = vunpack.c.h.b16 %v1418
    %v1797 = vunpack.c.l.b16 %v1419
    %v1798 = vunpack.c.h.b16 %v1419
    %v1799 = vunpack.c.l.b16 %v1420
    %v1800 = vunpack.c.h.b16 %v1420
    %v1801 = vunpack.c.l.b16 %v1421
    %v1802 = vunpack.c.h.b16 %v1421
    %v1803 = vunpack.c.l.b16 %v1422
    %v1804 = vunpack.c.h.b16 %v1422
    %v1805 = vunpack.c.l.b16 %v1423
    %v1806 = vunpack.c.h.b16 %v1423
    %v1807 = vunpack.c.l.b16 %v1424
    %v1808 = vunpack.c.h.b16 %v1424
    %v1809 = vunpack.c.l.b16 %v1425
    %v1810 = vunpack.c.h.b16 %v1425
    %v1811 = vunpack.c.l.b16 %v1426
    %v1812 = vunpack.c.h.b16 %v1426
    %v1813 = vunpack.c.l.b16 %v1427
    %v1814 = vunpack.c.h.b16 %v1427
    %v1815 = vunpack.c.l.b16 %v1428
    %v1816 = vunpack.c.h.b16 %v1428
    %v1817 = vunpack.c.l.b16 %v1429
    %v1818 = vunpack.c.h.b16 %v1429
    %v1819 = vunpack.c.l.b16 %v1430
    %v1820 = vunpack.c.h.b16 %v1430
    %v1821 = vunpack.c.l.b16 %v1431
    %v1822 = vunpack.c.h.b16 %v1431
    %v1823 = vunpack.c.l.b16 %v1432
    %v1824 = vunpack.c.h.b16 %v1432
    %v1825 = vunpack.c.l.b16 %v1433
    %v1826 = vunpack.c.h.b16 %v1433
    %v1827 = vunpack.c.l.b16 %v1434
    %v1828 = vunpack.c.h.b16 %v1434
    %v1829 = vunpack.c.l.b16 %v1435
    %v1830 = vunpack.c.h.b16 %v1435
    %v1831 = vunpack.c.l.b16 %v1436
    %v1832 = vunpack.c.h.b16 %v1436
    %v1833 = vunpack.c.l.b16 %v1437
    %v1834 = vunpack.c.h.b16 %v1437
    %v1835 = vunpack.c.l.b16 %v1438
    %v1836 = vunpack.c.h.b16 %v1438
    %v1837 = vunpack.c.l.b16 %v1439
    %v1838 = vunpack.c.h.b16 %v1439
    %v1839 = vunpack.c.l.b16 %v1440
    %v1840 = vunpack.c.h.b16 %v1440
    %v1841 = vunpack.c.l.b16 %v1441
    %v1842 = vunpack.c.h.b16 %v1441
    %v1843 = vunpack.c.l.b16 %v1442
    %v1844 = vunpack.c.h.b16 %v1442
    %v1845 = vunpack.c.l.b16 %v1443
    %v1846 = vunpack.c.h.b16 %v1443
    %v1847 = vunpack.c.l.b16 %v1444
    %v1848 = vunpack.c.h.b16 %v1444
    %v1849 = vunpack.c.l.b16 %v1445
    %v1850 = vunpack.c.h.b16 %v1445
    %v1851 = vunpack.c.l.b16 %v1446
    %v1852 = vunpack.c.h.b16 %v1446
    %v1853 = vunpack.c.l.b16 %v1447
    %v1854 = vunpack.c.h.b16 %v1447
    %v1855 = vunpack.c.l.b16 %v1448
    %v1856 = vunpack.c.h.b16 %v1448
    %v1857 = vunpack.c.l.b16 %v1449
    %v1858 = vunpack.c.h.b16 %v1449
    %v1859 = vunpack.c.l.b16 %v1450
    %v1860 = vunpack.c.h.b16 %v1450
    %v1861 = vunpack.c.l.b16 %v1451
    %v1862 = vunpack.c.h.b16 %v1451
    %v1863 = vunpack.c.l.b16 %v1452
    %v1864 = vunpack.c.h.b16 %v1452
    %v1865 = vunpack.c.l.b16 %v1453
    %v1866 = vunpack.c.h.b16 %v1453
    %v1867 = vunpack.c.l.b16 %v1454
    %v1868 = vunpack.c.h.b16 %v1454
    %v1869 = vunpack.c.l.b16 %v1455
    %v1870 = vunpack.c.h.b16 %v1455
    %v1871 = vunpack.c.l.b16 %v1456
    %v1872 = vunpack.c.h.b16 %v1456
    %v1873 = vunpack.c.l.b16 %v1457
    %v1874 = vunpack.c.h.b16 %v1457
    %v1875 = vunpack.c.l.b16 %v1458
    %v1876 = vunpack.c.h.b16 %v1458
    %v1877 = vunpack.c.l.b16 %v1459
    %v1878 = vunpack.c.h.b16 %v1459
    %v1879 = vunpack.c.l.b16 %v1460
    %v1880 = vunpack.c.h.b16 %v1460
    %v1881 = vpack.c.b16 %v1629, %v1625
    %v1882 = vpack.c.b16 %v1630, %v1626
    %v1883 = vpack.c.b16 %v1631, %v1627
    %v1884 = vpack.c.b16 %v1632, %v1628
    %v1885 = vpack.c.b16 %v1637, %v1633
    %v1886 = vpack.c.b16 %v1638, %v1634
    %v1887 = vpack.c.b16 %v1639, %v1635
    %v1888 = vpack.c.b16 %v1640, %v1636
    %v1889 = vpack.c.b16 %v1645, %v1641
    %v1890 = vpack.c.b16 %v1646, %v1642
    %v1891 = vpack.c.b16 %v1647, %v1643
    %v1892 = vpack.c.b16 %v1648, %v1644
    %v1893 = vpack.c.b16 %v1653, %v1649
    %v1894 = vpack.c.b16 %v1654, %v1650
    %v1895 = vpack.c.b16 %v1655, %v1651
    %v1896 = vpack.c.b16 %v1656, %v1652
    %v1897 = vpack.c.b16 %v1661, %v1657
    %v1898 = vpack.c.b16 %v1662, %v1658
    %v1899 = vpack.c.b16 %v1663, %v1659
    %v1900 = vpack.c.b16 %v1664, %v1660
    %v1901 = vpack.c.b16 %v1669, %v1665
    %v1902 = vpack.c.b16 %v1670, %v1666
    %v1903 = vpack.c.b16 %v1671, %v1667
    %v1904 = vpack.c.b16 %v1672, %v1668
    %v1905 = vpack.c.b16 %v1677, %v1673
    %v1906 = vpack.c.b16 %v1678, %v1674
    %v1907 = vpack.c.b16 %v1679, %v1675
    %v1908 = vpack.c.b16 %v1680, %v1676
    %v1909 = vpack.c.b16 %v1685, %v1681
    %v1910 = vpack.c.b16 %v1686, %v1682
    %v1911 = vpack.c.b16 %v1687, %v1683
    %v1912 = vpack.c.b16 %v1688, %v1684
    %v1913 = vpack.c.b16 %v1693, %v1689
    %v1914 = vpack.c.b16 %v1694, %v1690
    %v1915 = vpack.c.b16 %v1695, %v1691
    %v1916 = vpack.c.b16 %v1696, %v1692
    %v1917 = vpack.c.b16 %v1701, %v1697
    %v1918 = vpack.c.b16 %v1702, %v1698
    %v1919 = vpack.c.b16 %v1703, %v1699
    %v1920 = vpack.c.b16 %v1704, %v1700
    %v1921 = vpack.c.b16 %v1709, %v1705
    %v1922 = vpack.c.b16 %v1710, %v1706
    %v1923 = vpack.c.b16 %v1711, %v1707
    %v1924 = vpack.c.b16 %v1712, %v1708
    %v1925 = vpack.c.b16 %v1717, %v1713
    %v1926 = vpack.c.b16 %v1718, %v1714
    %v1927 = vpack.c.b16 %v1719, %v1715
    %v1928 = vpack.c.b16 %v1720, %v1716
    %v1929 = vpack.c.b16 %v1725, %v1721
    %v1930 = vpack.c.b16 %v1726, %v1722
    %v1931 = vpack.c.b16 %v1727, %v1723
    %v1932 = vpack.c.b16 %v1728, %v1724
    %v1933 = vpack.c.b16 %v1733, %v1729
    %v1934 = vpack.c.b16 %v1734, %v1730
    %v1935 = vpack.c.b16 %v1735, %v1731
    %v1936 = vpack.c.b16 %v1736, %v1732
    %v1937 = vpack.c.b16 %v1741, %v1737
    %v1938 = vpack.c.b16 %v1742, %v1738
    %v1939 = vpack.c.b16 %v1743, %v1739
    %v1940 = vpack.c.b16 %v1744, %v1740
    %v1941 = vpack.c.b16 %v1749, %v1745
    %v1942 = vpack.c.b16 %v1750, %v1746
    %v1943 = vpack.c.b16 %v1751, %v1747
    %v1944 = vpack.c.b16 %v1752, %v1748
    %v1945 = vpack.c.b16 %v1757, %v1753
    %v1946 = vpack.c.b16 %v1758, %v1754
    %v1947 = vpack.c.b16 %v1759, %v1755
    %v1948 = vpack.c.b16 %v1760, %v1756
    %v1949 = vpack.c.b16 %v1765, %v1761
    %v1950 = vpack.c.b16 %v1766, %v1762
    %v1951 = vpack.c.b16 %v1767, %v1763
    %v1952 = vpack.c.b16 %v1768, %v1764
    %v1953 = vpack.c.b16 %v1773, %v1769
    %v1954 = vpack.c.b16 %v1774, %v1770
    %v1955 = vpack.c.b16 %v1775, %v1771
    %v1956 = vpack.c.b16 %v1776, %v1772
    %v1957 = vpack.c.b16 %v1781, %v1777
    %v1958 = vpack.c.b16 %v1782, %v1778
    %v1959 = vpack.c.b16 %v1783, %v1779
    %v1960 = vpack.c.b16 %v1784, %v1780
    %v1961 = vpack.c.b16 %v1789, %v1785
    %v1962 = vpack.c.b16 %v1790, %v1786
    %v1963 = vpack.c.b16 %v1791, %v1787
    %v1964 = vpack.c.b16 %v1792, %v1788
    %v1965 = vpack.c.b16 %v1797, %v1793
    %v1966 = vpack.c.b16 %v1798, %v1794
    %v1967 = vpack.c.b16 %v1799, %v1795
    %v1968 = vpack.c.b16 %v1800, %v1796
    %v1969 = vpack.c.b16 %v1805, %v1801
    %v1970 = vpack.c.b16 %v1806, %v1802
    %v1971 = vpack.c.b16 %v1807, %v1803
    %v1972 = vpack.c.b16 %v1808, %v1804
    %v1973 = vpack.c.b16 %v1813, %v1809
    %v1974 = vpack.c.b16 %v1814, %v1810
    %v1975 = vpack.c.b16 %v1815, %v1811
    %v1976 = vpack.c.b16 %v1816, %v1812
    %v1977 = vpack.c.b16 %v1821, %v1817
    %v1978 = vpack.c.b16 %v1822, %v1818
    %v1979 = vpack.c.b16 %v1823, %v1819
    %v1980 = vpack.c.b16 %v1824, %v1820
    %v1981 = vpack.c.b16 %v1829, %v1825
    %v1982 = vpack.c.b16 %v1830, %v1826
    %v1983 = vpack.c.b16 %v1831, %v1827
    %v1984 = vpack.c.b16 %v1832, %v1828
    %v1985 = vpack.c.b16 %v1837, %v1833
    %v1986 = vpack.c.b16 %v1838, %v1834
    %v1987 = vpack.c.b16 %v1839, %v1835
    %v1988 = vpack.c.b16 %v1840, %v1836
    %v1989 = vpack.c.b16 %v1845, %v1841
    %v1990 = vpack.c.b16 %v1846, %v1842
    %v1991 = vpack.c.b16 %v1847, %v1843
    %v1992 = vpack.c.b16 %v1848, %v1844
    %v1993 = vpack.c.b16 %v1853, %v1849
    %v1994 = vpack.c.b16 %v1854, %v1850
    %v1995 = vpack.c.b16 %v1855, %v1851
    %v1996 = vpack.c.b16 %v1856, %v1852
    %v1997 = vpack.c.b16 %v1861, %v1857
    %v1998 = vpack.c.b16 %v1862, %v1858
    %v1999 = vpack.c.b16 %v1863, %v1859
    %v2000 = vpack.c.b16 %v1864, %v1860
    %v2001 = vpack.c.b16 %v1869, %v1865
    %v2002 = vpack.c.b16 %v1870, %v1866
    %v2003 = vpack.c.b16 %v1871, %v1867
    %v2004 = vpack.c.b16 %v1872, %v1868
    %v2005 = vpack.c.b16 %v1877, %v1873
    %v2006 = vpack.c.b16 %v1878, %v1874
    %v2007 = vpack.c.b16 %v1879, %v1875
    %v2008 = vpack.c.b16 %v1880, %v1876
    %2137 = vmatprep.subr.bf16.mxu0 %v1882
    %2138 = vmatpush1.bf16.msra.mxu0 %v1881
    %2139 = vmatprep.subr.bf16.mxu0 %v1886
    %2140 = vmatpush1.bf16.msra.mxu0 %v1885
    %2141 = vmatprep.subr.bf16.mxu0 %v1890
    %2142 = vmatpush1.bf16.msra.mxu0 %v1889
    %2143 = vmatprep.subr.bf16.mxu0 %v1894
    %2144 = vmatpush1.bf16.msra.mxu0 %v1893
    %2145 = vmatprep.subr.bf16.mxu0 %v1898
    %2146 = vmatpush1.bf16.msra.mxu0 %v1897
    %2147 = vmatprep.subr.bf16.mxu0 %v1902
    %2148 = vmatpush1.bf16.msra.mxu0 %v1901
    %2149 = vmatprep.subr.bf16.mxu0 %v1906
    %2150 = vmatpush1.bf16.msra.mxu0 %v1905
    %2151 = vmatprep.subr.bf16.mxu0 %v1910
    %2152 = vmatpush1.bf16.msra.mxu0 %v1909
    %2153 = vmatprep.subr.bf16.mxu0 %v1914
    %2154 = vmatpush1.bf16.msra.mxu0 %v1913
    %2155 = vmatprep.subr.bf16.mxu0 %v1918
    %2156 = vmatpush1.bf16.msra.mxu0 %v1917
    %2157 = vmatprep.subr.bf16.mxu0 %v1922
    %2158 = vmatpush1.bf16.msra.mxu0 %v1921
    %2159 = vmatprep.subr.bf16.mxu0 %v1926
    %2160 = vmatpush1.bf16.msra.mxu0 %v1925
    %2161 = vmatprep.subr.bf16.mxu0 %v1930
    %2162 = vmatpush1.bf16.msra.mxu0 %v1929
    %2163 = vmatprep.subr.bf16.mxu0 %v1934
    %2164 = vmatpush1.bf16.msra.mxu0 %v1933
    %2165 = vmatprep.subr.bf16.mxu0 %v1938
    %2166 = vmatpush1.bf16.msra.mxu0 %v1937
    %2167 = vmatprep.subr.bf16.mxu0 %v1942
    %2168 = vmatpush1.bf16.msra.mxu0 %v1941
    %2169 = vmatprep.mubr.bf16.mxu0 %v1490
    %2170 = vmatmul.mubr.bf16.gmra.mrb[0].mxu0 %v1489
    %v2171 = vpop.f32.mrb[0].mxu0
    %v2172 = vadd.f32 %v1466, %v2171
    %v2173 = vpop.f32.mrb[0].mxu0
    %v2174 = vadd.f32 %v1470, %v2173
    %v2175 = vpop.f32.mrb[0].mxu0
    %v2176 = vpop.f32.mrb[0].mxu0
    %2177 = vdwg.mxu0
    %2178 = vmatprep.subr.bf16.mxu0 %v1946
    %2179 = vmatpush1.bf16.msra.mxu0 %v1945
    %2180 = vmatprep.subr.bf16.mxu0 %v1950
    %2181 = vmatpush1.bf16.msra.mxu0 %v1949
    %2182 = vmatprep.subr.bf16.mxu0 %v1954
    %2183 = vmatpush1.bf16.msra.mxu0 %v1953
    %2184 = vmatprep.subr.bf16.mxu0 %v1958
    %2185 = vmatpush1.bf16.msra.mxu0 %v1957
    %2186 = vmatprep.subr.bf16.mxu0 %v1962
    %2187 = vmatpush1.bf16.msra.mxu0 %v1961
    %2188 = vmatprep.subr.bf16.mxu0 %v1966
    %2189 = vmatpush1.bf16.msra.mxu0 %v1965
    %2190 = vmatprep.subr.bf16.mxu0 %v1970
    %2191 = vmatpush1.bf16.msra.mxu0 %v1969
    %2192 = vmatprep.subr.bf16.mxu0 %v1974
    %2193 = vmatpush1.bf16.msra.mxu0 %v1973
    %2194 = vmatprep.subr.bf16.mxu0 %v1978
    %2195 = vmatpush1.bf16.msra.mxu0 %v1977
    %2196 = vmatprep.subr.bf16.mxu0 %v1982
    %2197 = vmatpush1.bf16.msra.mxu0 %v1981
    %2198 = vmatprep.subr.bf16.mxu0 %v1986
    %2199 = vmatpush1.bf16.msra.mxu0 %v1985
    %2200 = vmatprep.subr.bf16.mxu0 %v1990
    %2201 = vmatpush1.bf16.msra.mxu0 %v1989
    %2202 = vmatprep.subr.bf16.mxu0 %v1994
    %2203 = vmatpush1.bf16.msra.mxu0 %v1993
    %2204 = vmatprep.subr.bf16.mxu0 %v1998
    %2205 = vmatpush1.bf16.msra.mxu0 %v1997
    %2206 = vmatprep.subr.bf16.mxu0 %v2002
    %2207 = vmatpush1.bf16.msra.mxu0 %v2001
    %2208 = vmatprep.subr.bf16.mxu0 %v2006
    %2209 = vmatpush1.bf16.msra.mxu0 %v2005
    %2210 = vmatprep.mubr.bf16.mxu0 %v1492
    %2211 = vmatmul.mubr.bf16.gmra.mrb[0].mxu0 %v1491
    %v2212 = vpop.f32.mrb[0].mxu0
    %v2213 = vadd.f32 %v2172, %v2212
    %v2214 = vpop.f32.mrb[0].mxu0
    %v2215 = vadd.f32 %v2174, %v2214
    %v2216 = vpop.f32.mrb[0].mxu0
    %v2217 = vpop.f32.mrb[0].mxu0
    %2218 = vdwg.mxu0
    %2219 = vmatprep.subr.bf16.mxu0 %v1884
    %2220 = vmatpush1.bf16.msra.mxu0 %v1883
    %2221 = vmatprep.subr.bf16.mxu0 %v1888
    %2222 = vmatpush1.bf16.msra.mxu0 %v1887
    %2223 = vmatprep.subr.bf16.mxu0 %v1892
    %2224 = vmatpush1.bf16.msra.mxu0 %v1891
    %2225 = vmatprep.subr.bf16.mxu0 %v1896
    %2226 = vmatpush1.bf16.msra.mxu0 %v1895
    %2227 = vmatprep.subr.bf16.mxu0 %v1900
    %2228 = vmatpush1.bf16.msra.mxu0 %v1899
    %2229 = vmatprep.subr.bf16.mxu0 %v1904
    %2230 = vmatpush1.bf16.msra.mxu0 %v1903
    %2231 = vmatprep.subr.bf16.mxu0 %v1908
    %2232 = vmatpush1.bf16.msra.mxu0 %v1907
    %2233 = vmatprep.subr.bf16.mxu0 %v1912
    %2234 = vmatpush1.bf16.msra.mxu0 %v1911
    %2235 = vmatprep.subr.bf16.mxu0 %v1916
    %2236 = vmatpush1.bf16.msra.mxu0 %v1915
    %2237 = vmatprep.subr.bf16.mxu0 %v1920
    %2238 = vmatpush1.bf16.msra.mxu0 %v1919
    %2239 = vmatprep.subr.bf16.mxu0 %v1924
    %2240 = vmatpush1.bf16.msra.mxu0 %v1923
    %2241 = vmatprep.subr.bf16.mxu0 %v1928
    %2242 = vmatpush1.bf16.msra.mxu0 %v1927
    %2243 = vmatprep.subr.bf16.mxu0 %v1932
    %2244 = vmatpush1.bf16.msra.mxu0 %v1931
    %2245 = vmatprep.subr.bf16.mxu0 %v1936
    %2246 = vmatpush1.bf16.msra.mxu0 %v1935
    %2247 = vmatprep.subr.bf16.mxu0 %v1940
    %2248 = vmatpush1.bf16.msra.mxu0 %v1939
    %2249 = vmatprep.subr.bf16.mxu0 %v1944
    %2250 = vmatpush1.bf16.msra.mxu0 %v1943
    %2251 = vmatprep.mubr.bf16.mxu0 %v1490
    %2252 = vmatmul.mubr.bf16.gmra.mrb[0].mxu0 %v1489
    %v2253 = vpop.f32.mrb[0].mxu0
    %v2254 = vadd.f32 %v1474, %v2253
    %v2255 = vpop.f32.mrb[0].mxu0
    %v2256 = vadd.f32 %v1478, %v2255
    %v2257 = vpop.f32.mrb[0].mxu0
    %v2258 = vpop.f32.mrb[0].mxu0
    %2259 = vdwg.mxu0
    %2260 = vmatprep.subr.bf16.mxu0 %v1948
    %2261 = vmatpush1.bf16.msra.mxu0 %v1947
    %2262 = vmatprep.subr.bf16.mxu0 %v1952
    %2263 = vmatpush1.bf16.msra.mxu0 %v1951
    %2264 = vmatprep.subr.bf16.mxu0 %v1956
    %2265 = vmatpush1.bf16.msra.mxu0 %v1955
    %2266 = vmatprep.subr.bf16.mxu0 %v1960
    %2267 = vmatpush1.bf16.msra.mxu0 %v1959
    %2268 = vmatprep.subr.bf16.mxu0 %v1964
    %2269 = vmatpush1.bf16.msra.mxu0 %v1963
    %2270 = vmatprep.subr.bf16.mxu0 %v1968
    %2271 = vmatpush1.bf16.msra.mxu0 %v1967
    %2272 = vmatprep.subr.bf16.mxu0 %v1972
    %2273 = vmatpush1.bf16.msra.mxu0 %v1971
    %2274 = vmatprep.subr.bf16.mxu0 %v1976
    %2275 = vmatpush1.bf16.msra.mxu0 %v1975
    %2276 = vmatprep.subr.bf16.mxu0 %v1980
    %2277 = vmatpush1.bf16.msra.mxu0 %v1979
    %2278 = vmatprep.subr.bf16.mxu0 %v1984
    %2279 = vmatpush1.bf16.msra.mxu0 %v1983
    %2280 = vmatprep.subr.bf16.mxu0 %v1988
    %2281 = vmatpush1.bf16.msra.mxu0 %v1987
    %2282 = vmatprep.subr.bf16.mxu0 %v1992
    %2283 = vmatpush1.bf16.msra.mxu0 %v1991
    %2284 = vmatprep.subr.bf16.mxu0 %v1996
    %2285 = vmatpush1.bf16.msra.mxu0 %v1995
    %2286 = vmatprep.subr.bf16.mxu0 %v2000
    %2287 = vmatpush1.bf16.msra.mxu0 %v1999
    %2288 = vmatprep.subr.bf16.mxu0 %v2004
    %2289 = vmatpush1.bf16.msra.mxu0 %v2003
    %2290 = vmatprep.subr.bf16.mxu0 %v2008
    %2291 = vmatpush1.bf16.msra.mxu0 %v2007
    %2292 = vmatprep.mubr.bf16.mxu0 %v1492
    %2293 = vmatmul.mubr.bf16.gmra.mrb[0].mxu0 %v1491
    %v2294 = vpop.f32.mrb[0].mxu0
    %v2295 = vadd.f32 %v2254, %v2294
    %v2296 = vpop.f32.mrb[0].mxu0
    %v2297 = vadd.f32 %v2256, %v2296
    %v2298 = vpop.f32.mrb[0].mxu0
    %v2299 = vpop.f32.mrb[0].mxu0
    %2300 = vdwg.mxu0
    %2301 = vst [vmem:[#allocation4] sm:$0xff] %v2213
    %2302 = vst [vmem:[#allocation4 + $0x8] sm:$0xff] %v2215
    %2303 = vst [vmem:[#allocation4 + $0x10] sm:$0xff] %v2295
    %vm2304 = vcmask 523264
    %2305 = vst.msk [vmem:[#allocation4 + $0x18] sm:$0xff] %vm2304, %v2297
    // Predicated region
    $region38: #{tpu_custom_call.1} parent=1 // pred_check
      _
    $region39: #{tpu_custom_call.1} parent=1 // pred_check_branch
      %2307 = sbr.rel (0) target = $region41
    $region40: #{tpu_custom_call.1} parent=1 // pred_region
      %s2309 = ssub.s32 512, 512
      %2310 = vsyncadd [#allocation5], %s2309
      %s2312 = sshll.u32 [#allocation4], 4
      %s2313 = int_to_ptr.vmem [resolvable:$true] %s2312
      %2315 = dma.vmem_to_hbm [thread:$0]  %s2313, 512, %s9, [#allocation5]
    $region41: #{tpu_custom_call.1} parent=1 // pred_fallthru
      _
    // Predicated region
    $region42: #{tpu_custom_call.1} parent=1 // pred_check
      _
    $region43: #{tpu_custom_call.1} parent=1 // pred_check_branch
      %2317 = sbr.rel (0) target = $region45
    $region44: #{tpu_custom_call.1} parent=1 // pred_region
      %2318 = dma.done [#allocation5], 512
    $region45: #{tpu_custom_call.1} parent=1 // pred_fallthru
      _
    %2319 = vsyncpa [#allocation5], 1

</llo_original>
